<compile_context>
chip_gen: v7x
topology: tpu7x:2x2x1
jax: 0.10.0
libtpu: 0.0.40
codegen_flags: <defaults>
</compile_context>

<pallas_src>
import functools

import jax
import jax.numpy as jnp
from jax.experimental import pallas as pl
from jax.experimental.pallas import tpu as pltpu


# ------------------------------- in-kernel helpers --------------------------------

def _stack_taps(h, mask_ref, width):
    """Stacked-tap operand for a 3x3, padding=1 conv on a flattened (Cin, H*W) slab.

    Returns (9*Cin, HW): rows k*Cin:(k+1)*Cin hold tap k = kh*3+kw, i.e.
    out[:, p] = h[:, p + dh*W + dw] zeroed where the source pixel is out of bounds.
    pltpu.roll follows the jnp.roll convention (out[j] = x[(j - shift) % n]), so
    shift = (-s) % HW yields out[p] = x[p + s].
    """
    hw = h.shape[-1]
    taps = []
    for k in range(9):
        dh, dw = k // 3 - 1, k % 3 - 1
        s = dh * width + dw
        shifted = h if s == 0 else pltpu.roll(h, shift=(-s) % hw, axis=1)
        taps.append(shifted * mask_ref[k])                 # (Cin,HW) * (1,HW)
    return jnp.concatenate(taps, axis=0)                   # (9*Cin, HW)


def _group_norm_silu(x, pavg, gamma, beta, *, eps, inv_n, per_channel):
    """GroupNorm + SiLU on a (C, H*W) slab.

    Lane reductions first: sum(x) / sum((x-mean)^2) collapse to (C,1) columns, then the
    per-group averaging is either a pure scale (groups == C, the shipped config) or a
    tiny (C,C)x(C,1) matvec (pavg carries the 1/(g*H*W) factor).  Two-pass centered
    variance is kept (safer than E[x^2]-mean^2).
    """
    row_sum = jnp.sum(x, axis=1, keepdims=True)                              # (C,1)
    if per_channel:
        mean = row_sum * inv_n
    else:
        mean = jnp.dot(pavg, row_sum, preferred_element_type=jnp.float32)    # (C,1)
    xc = x - mean
    row_ss = jnp.sum(xc * xc, axis=1, keepdims=True)                         # (C,1)
    if per_channel:
        var = row_ss * inv_n
    else:
        var = jnp.dot(pavg, row_ss, preferred_element_type=jnp.float32)      # (C,1)
    y = xc * (jax.lax.rsqrt(var + eps) * gamma) + beta
    return y * jax.nn.sigmoid(y)                                             # SiLU


# ----------------------------------- kernel ---------------------------------------

def _down_block_kernel(x_ref, pavg1_ref, gn1g_ref, gn1b_ref, w1_ref, add1_ref,
                       pavg2_ref, gn2g_ref, gn2b_ref, w2_ref, b2_ref,
                       wd_ref, bd_ref, mask_ref, sel_ref,
                       skip_ref, down_ref,
                       *, width, eps, bt, pc1, pc2, inv_n):
    for i in range(bt):                          # static unroll over batch elems/step
        x = x_ref[i]                                                    # (Cin, HW)

        # SiLU(GroupNorm1(x))
        h = _group_norm_silu(x, pavg1_ref[...], gn1g_ref[...], gn1b_ref[...],
                             eps=eps, inv_n=inv_n, per_channel=pc1)
        # conv1 as ONE matmul; bias + SiLU(time_proj) pre-folded in the wrapper
        h = jnp.dot(w1_ref[...], _stack_taps(h, mask_ref, width),
                    preferred_element_type=jnp.float32) + add1_ref[i]
        # SiLU(GroupNorm2(h)); Dropout2d -> identity (inference semantics)
        h = _group_norm_silu(h, pavg2_ref[...], gn2g_ref[...], gn2b_ref[...],
                             eps=eps, inv_n=inv_n, per_channel=pc2)
        # conv2 (+bias); attention = nn.Identity()
        sk = jnp.dot(w2_ref[...], _stack_taps(h, mask_ref, width),
                     preferred_element_type=jnp.float32) + b2_ref[...]
        skip_ref[i] = sk                                                # lane-dense store

        # downsample conv: stride-1 full-res matmul, then compact to the even
        # positions with a (HW, HW/4) selection matmul -> only (Cout, HW/4) is stored.
        dn = jnp.dot(wd_ref[...], _stack_taps(sk, mask_ref, width),
                     preferred_element_type=jnp.float32)                # (Cout, HW)
        down_ref[i] = jnp.dot(dn, sel_ref[...],
                              preferred_element_type=jnp.float32) + bd_ref[...]


# -------------------------------- wrapper glue -------------------------------------

def _group_avg_matrix(c, groups, hw):
    g = c // groups
    idx = jnp.arange(c)
    same = (idx[:, None] // g) == (idx[None, :] // g)
    return same.astype(jnp.float32) / float(g * hw)


def _tap_masks(h, w):
    ph = jnp.arange(h * w) // w
    pw = jnp.arange(h * w) % w
    masks = []
    for k in range(9):
        dh, dw = k // 3 - 1, k % 3 - 1
        masks.append((ph + dh >= 0) & (ph + dh < h) & (pw + dw >= 0) & (pw + dw < w))
    return jnp.stack(masks).astype(jnp.float32).reshape(9, 1, h * w)


def _stacked_weights(w_oihw):
    """(Cout, Cin, 3, 3) -> (Cout, 9*Cin); column block k = kh*3+kw holds w[:,:,kh,kw]."""
    co, ci = w_oihw.shape[0], w_oihw.shape[1]
    return jnp.transpose(w_oihw, (0, 2, 3, 1)).reshape(co, 9 * ci)


def _downsample_select(h, w):
    """(HW, Hd*Wd) selection matrix picking the even (h, w) positions (stride-2 taps)."""
    hd, wd = (h + 1) // 2, (w + 1) // 2
    q = jnp.arange(hd * wd)
    src = (2 * (q // wd)) * w + 2 * (q % wd)
    p = jnp.arange(h * w)
    return (p[:, None] == src[None, :]).astype(jnp.float32)


def _pick_batch_tile(b, cin, cmid, cout, hw, hwd):
    """Batch elements per grid step: amortizes the serial grid on v5e/v6e (single TC),
    keeps >= 2 grid steps so both v7x TensorCores get work, caps per-step VMEM."""
    if b <= 1:
        return 1
    per_elem = 4 * 2 * (cin * hw + cmid + cmid * hw + cout * hwd)  # f32, double-buffered
    bt = b // 2 if b % 2 == 0 else 1
    bt = max(1, min(bt, (8 * 1024 * 1024) // max(per_elem, 1)))
    while b % bt:
        bt -= 1
    return bt


def _vmem_limit_bytes(bt, cin, cmid, cout, hw, hwd):
    """Scoped-VMEM request derived from the actual double-buffered block sizes."""
    blocks = (bt * cin * hw + cin * cin + 2 * cin
              + cmid * 9 * cin + bt * cmid
              + cmid * cmid + 2 * cmid + cmid * 9 * cmid + cmid
              + cout * 9 * cmid + cout
              + 9 * hw + hw * hwd
              + bt * cmid * hw + bt * cout * hwd)
    est = 2 * 4 * blocks                     # 2x for double buffering, f32
    # generous headroom for in-kernel temporaries / compiler scratch, capped well below
    # v7x's 64 MiB physical VMEM.
    return int(min(32 * 1024 * 1024, max(8 * 1024 * 1024, 8 * est)))


@jax.jit
def _down_block_impl(x_nchw, time_emb, params):
    B, cin, H, W = x_nchw.shape
    cmid = params["conv1_w"].shape[0]
    cout = params["down_w"].shape[0]
    hw = H * W
    Hd, Wd = (H + 1) // 2, (W + 1) // 2
    hwd = Hd * Wd
    groups, eps = 8, 1e-5

    x = x_nchw.reshape(B, cin, hw)                    # free collapse, NCHW preserved

    # Tiny time-proj Linear + SiLU in plain XLA, folded with conv1's bias.
    t = jnp.dot(time_emb, params["time_w"].T,
                precision=jax.lax.Precision.HIGHEST) + params["time_b"]
    t = t * jax.nn.sigmoid(t)                         # SiLU(Linear(time_emb))
    add1 = (params["conv1_b"][None, :] + t).reshape(B, cmid, 1)

    bt = _pick_batch_tile(B, cin, cmid, cout, hw, hwd)
    pc1 = (groups == cin)                             # g == 1 -> per-channel stats
    pc2 = (groups == cmid)

    operands = (
        x,
        _group_avg_matrix(cin, groups, hw),
        params["gn1_g"].reshape(cin, 1), params["gn1_b"].reshape(cin, 1),
        _stacked_weights(params["conv1_w"]),
        add1,
        _group_avg_matrix(cmid, groups, hw),
        params["gn2_g"].reshape(cmid, 1), params["gn2_b"].reshape(cmid, 1),
        _stacked_weights(params["conv2_w"]),
        params["conv2_b"].reshape(cmid, 1),
        _stacked_weights(params["down_w"]),
        params["down_b"].reshape(cout, 1),
        _tap_masks(H, W),
        _downsample_select(H, W),
    )

    in_specs = [
        pl.BlockSpec((bt, cin, hw), lambda b: (b, 0, 0)),        # x
        pl.BlockSpec((cin, cin), lambda b: (0, 0)),              # group-avg matrix 1
        pl.BlockSpec((cin, 1), lambda b: (0, 0)),                # gn1 gamma
        pl.BlockSpec((cin, 1), lambda b: (0, 0)),                # gn1 beta
        pl.BlockSpec((cmid, 9 * cin), lambda b: (0, 0)),         # conv1 stacked weights
        pl.BlockSpec((bt, cmid, 1), lambda b: (b, 0, 0)),        # conv1 bias + SiLU(t)
        pl.BlockSpec((cmid, cmid), lambda b: (0, 0)),            # group-avg matrix 2
        pl.BlockSpec((cmid, 1), lambda b: (0, 0)),               # gn2 gamma
        pl.BlockSpec((cmid, 1), lambda b: (0, 0)),               # gn2 beta
        pl.BlockSpec((cmid, 9 * cmid), lambda b: (0, 0)),        # conv2 stacked weights
        pl.BlockSpec((cmid, 1), lambda b: (0, 0)),               # conv2 bias
        pl.BlockSpec((cout, 9 * cmid), lambda b: (0, 0)),        # downsample stacked w
        pl.BlockSpec((cout, 1), lambda b: (0, 0)),               # downsample bias
        pl.BlockSpec((9, 1, hw), lambda b: (0, 0, 0)),           # tap validity masks
        pl.BlockSpec((hw, hwd), lambda b: (0, 0)),               # stride-2 selection
    ]
    out_specs = (
        pl.BlockSpec((bt, cmid, hw), lambda b: (b, 0, 0)),       # skip
        pl.BlockSpec((bt, cout, hwd), lambda b: (b, 0, 0)),      # down (stride-2, HW/4)
    )

    skip, down = pl.pallas_call(
        functools.partial(_down_block_kernel, width=W, eps=eps, bt=bt,
                          pc1=pc1, pc2=pc2, inv_n=1.0 / float(hw)),
        out_shape=(jax.ShapeDtypeStruct((B, cmid, hw), jnp.float32),
                   jax.ShapeDtypeStruct((B, cout, hwd), jnp.float32)),
        grid=(B // bt,),
        in_specs=in_specs,
        out_specs=out_specs,
        compiler_params=pltpu.CompilerParams(
            dimension_semantics=("parallel",),        # batch split across v7x TCs
            vmem_limit_bytes=_vmem_limit_bytes(bt, cin, cmid, cout, hw, hwd)),
    )(*operands)

    skip = skip.reshape(B, cmid, H, W)
    down = down.reshape(B, cout, Hd, Wd)
    return down, skip


def down_block_forward(x_nchw, time_emb, params):
    """Returns (down, skip) in NCHW, matching PyTorch DownBlock.forward."""
    return _down_block_impl(x_nchw, time_emb, params)


# ------------------------------ params / reference ---------------------------------

def init_params(key, in_channels, out_channels, time_emb_dims):
    cmid = out_channels // 2
    ks = jax.random.split(key, 12)
    n = lambda k, shape, s=0.1: s * jax.random.normal(k, shape, jnp.float32)
    return {
        "gn1_g": 1.0 + n(ks[0], (in_channels,)),
        "gn1_b": n(ks[1], (in_channels,)),
        "conv1_w": n(ks[2], (cmid, in_channels, 3, 3)),    # OIHW (PyTorch layout)
        "conv1_b": n(ks[3], (cmid,)),
        "gn2_g": 1.0 + n(ks[4], (cmid,)),
        "gn2_b": n(ks[5], (cmid,)),
        "conv2_w": n(ks[6], (cmid, cmid, 3, 3)),
        "conv2_b": n(ks[7], (cmid,)),
        "down_w": n(ks[8], (out_channels, cmid, 3, 3)),
        "down_b": n(ks[9], (out_channels,)),
        "time_w": n(ks[10], (cmid, time_emb_dims)),        # PyTorch Linear (out, in)
        "time_b": n(ks[11], (cmid,)),
    }


def _reference_forward(x, time_emb, params, *, groups=8, eps=1e-5):
    """Pure-XLA reference implementing the PyTorch DownBlock.forward literally."""
    silu = lambda v: v * jax.nn.sigmoid(v)

    def group_norm(h, gamma, beta):
        b, c, hh, ww = h.shape
        g = c // groups
        hg = h.reshape(b, groups, g, hh, ww)
        mean = jnp.mean(hg, axis=(2, 3, 4), keepdims=True)
        var = jnp.mean((hg - mean) ** 2, axis=(2, 3, 4), keepdims=True)
        hn = ((hg - mean) * jax.lax.rsqrt(var + eps)).reshape(b, c, hh, ww)
        return hn * gamma.reshape(1, c, 1, 1) + beta.reshape(1, c, 1, 1)

    def conv(h, w, bias, stride):
        out = jax.lax.conv_general_dilated(
            h, w, window_strides=(stride, stride), padding=((1, 1), (1, 1)),
            dimension_numbers=("NCHW", "OIHW", "NCHW"),
            precision=jax.lax.Precision.HIGHEST)
        return out + bias.reshape(1, -1, 1, 1)

    t = jnp.dot(time_emb, params["time_w"].T,
                precision=jax.lax.Precision.HIGHEST) + params["time_b"]
    h = silu(group_norm(x, params["gn1_g"], params["gn1_b"]))
    h = conv(h, params["conv1_w"], params["conv1_b"], 1) + silu(t)[:, :, None, None]
    h = silu(group_norm(h, params["gn2_g"], params["gn2_b"]))
    h = conv(h, params["conv2_w"], params["conv2_b"], 1)
    skip = h
    down = conv(h, params["down_w"], params["down_b"], 2)
    return down, skip


if __name__ == "__main__":
    B, in_channels, out_channels, time_emb_dims, H, W = 2, 8, 16, 32, 16, 16

    key = jax.random.PRNGKey(0)
    kx, kt, kp = jax.random.split(key, 3)
    x = jax.random.normal(kx, (B, in_channels, H, W), jnp.float32)   # NCHW like PyTorch
    time_emb = jax.random.normal(kt, (B, time_emb_dims), jnp.float32)
    params = init_params(kp, in_channels, out_channels, time_emb_dims)

    down, skip = down_block_forward(x, time_emb, params)
    jax.block_until_ready((down, skip))

    assert down.shape == (B, out_channels, H // 2, W // 2), down.shape
    assert skip.shape == (B, out_channels // 2, H, W), skip.shape

    ref_down, ref_skip = _reference_forward(x, time_emb, params)
    assert jnp.allclose(down, ref_down, atol=2e-3, rtol=2e-3), (
        "down mismatch, max abs err = %e"
        % float(jnp.max(jnp.abs(down - ref_down))))
    assert jnp.allclose(skip, ref_skip, atol=2e-3, rtol=2e-3), (
        "skip mismatch, max abs err = %e"
        % float(jnp.max(jnp.abs(skip - ref_skip))))
    print("KERNEL_OK")
</pallas_src>

<mosaic_0001>
module attributes {stable_mosaic.version = 11 : i64} {
  func.func @_down_block_kernel(%arg0: i32, %arg1: memref<1x8x256xf32, #tpu.memory_space<vmem>>, %arg2: memref<8x8xf32, #tpu.memory_space<vmem>>, %arg3: memref<8x1xf32, #tpu.memory_space<vmem>>, %arg4: memref<8x1xf32, #tpu.memory_space<vmem>>, %arg5: memref<8x72xf32, #tpu.memory_space<vmem>>, %arg6: memref<1x8x1xf32, #tpu.memory_space<vmem>>, %arg7: memref<8x8xf32, #tpu.memory_space<vmem>>, %arg8: memref<8x1xf32, #tpu.memory_space<vmem>>, %arg9: memref<8x1xf32, #tpu.memory_space<vmem>>, %arg10: memref<8x72xf32, #tpu.memory_space<vmem>>, %arg11: memref<8x1xf32, #tpu.memory_space<vmem>>, %arg12: memref<16x72xf32, #tpu.memory_space<vmem>>, %arg13: memref<16x1xf32, #tpu.memory_space<vmem>>, %arg14: memref<9x1x256xf32, #tpu.memory_space<vmem>>, %arg15: memref<256x64xf32, #tpu.memory_space<vmem>>, %arg16: memref<1x8x256xf32, #tpu.memory_space<vmem>>, %arg17: memref<1x16x64xf32, #tpu.memory_space<vmem>>) attributes {dimension_semantics = [#tpu.dimension_semantics<parallel>], iteration_bounds = array<i64: 2>, scalar_prefetch = 0 : i64, scratch_operands = 0 : i64, tpu.core_type = #tpu.core_type<tc>, window_params = [{transform_indices = @transform_0, window_bounds = array<i64: 1, 8, 256>}, {pipeline_mode = #tpu.pipeline_mode<synchronous>, transform_indices = @transform_1, window_bounds = array<i64: 8, 8>}, {pipeline_mode = #tpu.pipeline_mode<synchronous>, transform_indices = @transform_2, window_bounds = array<i64: 8, 1>}, {pipeline_mode = #tpu.pipeline_mode<synchronous>, transform_indices = @transform_3, window_bounds = array<i64: 8, 1>}, {pipeline_mode = #tpu.pipeline_mode<synchronous>, transform_indices = @transform_4, window_bounds = array<i64: 8, 72>}, {transform_indices = @transform_5, window_bounds = array<i64: 1, 8, 1>}, {pipeline_mode = #tpu.pipeline_mode<synchronous>, transform_indices = @transform_6, window_bounds = array<i64: 8, 8>}, {pipeline_mode = #tpu.pipeline_mode<synchronous>, transform_indices = @transform_7, window_bounds = array<i64: 8, 1>}, {pipeline_mode = #tpu.pipeline_mode<synchronous>, transform_indices = @transform_8, window_bounds = array<i64: 8, 1>}, {pipeline_mode = #tpu.pipeline_mode<synchronous>, transform_indices = @transform_9, window_bounds = array<i64: 8, 72>}, {pipeline_mode = #tpu.pipeline_mode<synchronous>, transform_indices = @transform_10, window_bounds = array<i64: 8, 1>}, {pipeline_mode = #tpu.pipeline_mode<synchronous>, transform_indices = @transform_11, window_bounds = array<i64: 16, 72>}, {pipeline_mode = #tpu.pipeline_mode<synchronous>, transform_indices = @transform_12, window_bounds = array<i64: 16, 1>}, {pipeline_mode = #tpu.pipeline_mode<synchronous>, transform_indices = @transform_13, window_bounds = array<i64: 9, 1, 256>}, {pipeline_mode = #tpu.pipeline_mode<synchronous>, transform_indices = @transform_14, window_bounds = array<i64: 256, 64>}, {transform_indices = @transform_15, window_bounds = array<i64: 1, 8, 256>}, {transform_indices = @transform_16, window_bounds = array<i64: 1, 16, 64>}]} {
    %c0 = arith.constant 0 : index
    %c0_0 = arith.constant 0 : index
    %c0_1 = arith.constant 0 : index
    %0 = vector.load %arg1[%c0, %c0_0, %c0_1] : memref<1x8x256xf32, #tpu.memory_space<vmem>>, vector<1x8x256xf32>
    %1 = vector.shape_cast %0 : vector<1x8x256xf32> to vector<8x256xf32>
    %c0_2 = arith.constant 0 : index
    %c0_3 = arith.constant 0 : index
    %2 = vector.load %arg3[%c0_2, %c0_3] : memref<8x1xf32, #tpu.memory_space<vmem>>, vector<8x1xf32>
    %c0_4 = arith.constant 0 : index
    %c0_5 = arith.constant 0 : index
    %3 = vector.load %arg4[%c0_4, %c0_5] : memref<8x1xf32, #tpu.memory_space<vmem>>, vector<8x1xf32>
    %cst = arith.constant dense<0.000000e+00> : vector<8xf32>
    %4 = vector.multi_reduction <add>, %1, %cst [1] : vector<8x256xf32> to vector<8xf32>
    %5 = vector.shape_cast %4 : vector<8xf32> to vector<8x1xf32>
    %cst_6 = arith.constant 3.906250e-03 : f32
    %6 = vector.broadcast %cst_6 : f32 to vector<8x1xf32>
    %7 = arith.mulf %5, %6 : vector<8x1xf32>
    %8 = vector.broadcast %7 : vector<8x1xf32> to vector<8x256xf32>
    %9 = arith.subf %1, %8 : vector<8x256xf32>
    %10 = arith.mulf %9, %9 : vector<8x256xf32>
    %cst_7 = arith.constant dense<0.000000e+00> : vector<8xf32>
    %11 = vector.multi_reduction <add>, %10, %cst_7 [1] : vector<8x256xf32> to vector<8xf32>
    %12 = vector.shape_cast %11 : vector<8xf32> to vector<8x1xf32>
    %cst_8 = arith.constant 3.906250e-03 : f32
    %13 = vector.broadcast %cst_8 : f32 to vector<8x1xf32>
    %14 = arith.mulf %12, %13 : vector<8x1xf32>
    %cst_9 = arith.constant 9.99999974E-6 : f32
    %15 = vector.broadcast %cst_9 : f32 to vector<8x1xf32>
    %16 = arith.addf %14, %15 : vector<8x1xf32>
    %17 = math.rsqrt %16 : vector<8x1xf32>
    %18 = arith.mulf %17, %2 : vector<8x1xf32>
    %19 = vector.broadcast %18 : vector<8x1xf32> to vector<8x256xf32>
    %20 = arith.mulf %9, %19 : vector<8x256xf32>
    %21 = vector.broadcast %3 : vector<8x1xf32> to vector<8x256xf32>
    %22 = arith.addf %20, %21 : vector<8x256xf32>
    %23 = arith.negf %22 : vector<8x256xf32>
    %24 = math.exp %23 : vector<8x256xf32>
    %cst_10 = arith.constant 1.000000e+00 : f32
    %25 = vector.broadcast %cst_10 : f32 to vector<8x256xf32>
    %26 = arith.addf %25, %24 : vector<8x256xf32>
    %27 = arith.divf %25, %26 : vector<8x256xf32>
    %28 = arith.mulf %22, %27 : vector<8x256xf32>
    %c0_11 = arith.constant 0 : index
    %c0_12 = arith.constant 0 : index
    %29 = vector.load %arg5[%c0_11, %c0_12] : memref<8x72xf32, #tpu.memory_space<vmem>>, vector<8x72xf32>
    %c17_i32 = arith.constant 17 : i32
    %30 = tpu.dynamic_rotate %28 by %c17_i32 dim 1 : vector<8x256xf32>, i32 -> vector<8x256xf32>
    %c0_13 = arith.constant 0 : index
    %c0_14 = arith.constant 0 : index
    %c0_15 = arith.constant 0 : index
    %31 = vector.load %arg14[%c0_13, %c0_14, %c0_15] : memref<9x1x256xf32, #tpu.memory_space<vmem>>, vector<1x1x256xf32>
    %32 = vector.shape_cast %31 : vector<1x1x256xf32> to vector<1x256xf32>
    %33 = vector.broadcast %32 : vector<1x256xf32> to vector<8x256xf32>
    %34 = arith.mulf %30, %33 : vector<8x256xf32>
    %c16_i32 = arith.constant 16 : i32
    %35 = tpu.dynamic_rotate %28 by %c16_i32 dim 1 : vector<8x256xf32>, i32 -> vector<8x256xf32>
    %c1 = arith.constant 1 : index
    %c0_16 = arith.constant 0 : index
    %c0_17 = arith.constant 0 : index
    %36 = vector.load %arg14[%c1, %c0_16, %c0_17] : memref<9x1x256xf32, #tpu.memory_space<vmem>>, vector<1x1x256xf32>
    %37 = vector.shape_cast %36 : vector<1x1x256xf32> to vector<1x256xf32>
    %38 = vector.broadcast %37 : vector<1x256xf32> to vector<8x256xf32>
    %39 = arith.mulf %35, %38 : vector<8x256xf32>
    %c15_i32 = arith.constant 15 : i32
    %40 = tpu.dynamic_rotate %28 by %c15_i32 dim 1 : vector<8x256xf32>, i32 -> vector<8x256xf32>
    %c2 = arith.constant 2 : index
    %c0_18 = arith.constant 0 : index
    %c0_19 = arith.constant 0 : index
    %41 = vector.load %arg14[%c2, %c0_18, %c0_19] : memref<9x1x256xf32, #tpu.memory_space<vmem>>, vector<1x1x256xf32>
    %42 = vector.shape_cast %41 : vector<1x1x256xf32> to vector<1x256xf32>
    %43 = vector.broadcast %42 : vector<1x256xf32> to vector<8x256xf32>
    %44 = arith.mulf %40, %43 : vector<8x256xf32>
    %c1_i32 = arith.constant 1 : i32
    %45 = tpu.dynamic_rotate %28 by %c1_i32 dim 1 : vector<8x256xf32>, i32 -> vector<8x256xf32>
    %c3 = arith.constant 3 : index
    %c0_20 = arith.constant 0 : index
    %c0_21 = arith.constant 0 : index
    %46 = vector.load %arg14[%c3, %c0_20, %c0_21] : memref<9x1x256xf32, #tpu.memory_space<vmem>>, vector<1x1x256xf32>
    %47 = vector.shape_cast %46 : vector<1x1x256xf32> to vector<1x256xf32>
    %48 = vector.broadcast %47 : vector<1x256xf32> to vector<8x256xf32>
    %49 = arith.mulf %45, %48 : vector<8x256xf32>
    %c4 = arith.constant 4 : index
    %c0_22 = arith.constant 0 : index
    %c0_23 = arith.constant 0 : index
    %50 = vector.load %arg14[%c4, %c0_22, %c0_23] : memref<9x1x256xf32, #tpu.memory_space<vmem>>, vector<1x1x256xf32>
    %51 = vector.shape_cast %50 : vector<1x1x256xf32> to vector<1x256xf32>
    %52 = vector.broadcast %51 : vector<1x256xf32> to vector<8x256xf32>
    %53 = arith.mulf %28, %52 : vector<8x256xf32>
    %c255_i32 = arith.constant 255 : i32
    %54 = tpu.dynamic_rotate %28 by %c255_i32 dim 1 : vector<8x256xf32>, i32 -> vector<8x256xf32>
    %c5 = arith.constant 5 : index
    %c0_24 = arith.constant 0 : index
    %c0_25 = arith.constant 0 : index
    %55 = vector.load %arg14[%c5, %c0_24, %c0_25] : memref<9x1x256xf32, #tpu.memory_space<vmem>>, vector<1x1x256xf32>
    %56 = vector.shape_cast %55 : vector<1x1x256xf32> to vector<1x256xf32>
    %57 = vector.broadcast %56 : vector<1x256xf32> to vector<8x256xf32>
    %58 = arith.mulf %54, %57 : vector<8x256xf32>
    %c241_i32 = arith.constant 241 : i32
    %59 = tpu.dynamic_rotate %28 by %c241_i32 dim 1 : vector<8x256xf32>, i32 -> vector<8x256xf32>
    %c6 = arith.constant 6 : index
    %c0_26 = arith.constant 0 : index
    %c0_27 = arith.constant 0 : index
    %60 = vector.load %arg14[%c6, %c0_26, %c0_27] : memref<9x1x256xf32, #tpu.memory_space<vmem>>, vector<1x1x256xf32>
    %61 = vector.shape_cast %60 : vector<1x1x256xf32> to vector<1x256xf32>
    %62 = vector.broadcast %61 : vector<1x256xf32> to vector<8x256xf32>
    %63 = arith.mulf %59, %62 : vector<8x256xf32>
    %c240_i32 = arith.constant 240 : i32
    %64 = tpu.dynamic_rotate %28 by %c240_i32 dim 1 : vector<8x256xf32>, i32 -> vector<8x256xf32>
    %c7 = arith.constant 7 : index
    %c0_28 = arith.constant 0 : index
    %c0_29 = arith.constant 0 : index
    %65 = vector.load %arg14[%c7, %c0_28, %c0_29] : memref<9x1x256xf32, #tpu.memory_space<vmem>>, vector<1x1x256xf32>
    %66 = vector.shape_cast %65 : vector<1x1x256xf32> to vector<1x256xf32>
    %67 = vector.broadcast %66 : vector<1x256xf32> to vector<8x256xf32>
    %68 = arith.mulf %64, %67 : vector<8x256xf32>
    %c239_i32 = arith.constant 239 : i32
    %69 = tpu.dynamic_rotate %28 by %c239_i32 dim 1 : vector<8x256xf32>, i32 -> vector<8x256xf32>
    %c8 = arith.constant 8 : index
    %c0_30 = arith.constant 0 : index
    %c0_31 = arith.constant 0 : index
    %70 = vector.load %arg14[%c8, %c0_30, %c0_31] : memref<9x1x256xf32, #tpu.memory_space<vmem>>, vector<1x1x256xf32>
    %71 = vector.shape_cast %70 : vector<1x1x256xf32> to vector<1x256xf32>
    %72 = vector.broadcast %71 : vector<1x256xf32> to vector<8x256xf32>
    %73 = arith.mulf %69, %72 : vector<8x256xf32>
    %74 = tpu.concatenate %34, %39, %44, %49, %53, %58, %63, %68, %73 in 0 : vector<8x256xf32>, vector<8x256xf32>, vector<8x256xf32>, vector<8x256xf32>, vector<8x256xf32>, vector<8x256xf32>, vector<8x256xf32>, vector<8x256xf32>, vector<8x256xf32> -> vector<72x256xf32>
    %cst_32 = arith.constant dense<0.000000e+00> : vector<8x256xf32>
    %75 = tpu.matmul %29, %74, %cst_32 {dimension_numbers = #tpu.dot_dimension_numbers<[1], [0], [0], [1], [0, 0, 1, 1], [], []>} : vector<8x72xf32>, vector<72x256xf32>, vector<8x256xf32> -> vector<8x256xf32>
    %c0_33 = arith.constant 0 : index
    %c0_34 = arith.constant 0 : index
    %c0_35 = arith.constant 0 : index
    %76 = vector.load %arg6[%c0_33, %c0_34, %c0_35] : memref<1x8x1xf32, #tpu.memory_space<vmem>>, vector<1x8x1xf32>
    %77 = vector.shape_cast %76 : vector<1x8x1xf32> to vector<8x1xf32>
    %78 = vector.broadcast %77 : vector<8x1xf32> to vector<8x256xf32>
    %79 = arith.addf %75, %78 : vector<8x256xf32>
    %c0_36 = arith.constant 0 : index
    %c0_37 = arith.constant 0 : index
    %80 = vector.load %arg8[%c0_36, %c0_37] : memref<8x1xf32, #tpu.memory_space<vmem>>, vector<8x1xf32>
    %c0_38 = arith.constant 0 : index
    %c0_39 = arith.constant 0 : index
    %81 = vector.load %arg9[%c0_38, %c0_39] : memref<8x1xf32, #tpu.memory_space<vmem>>, vector<8x1xf32>
    %cst_40 = arith.constant dense<0.000000e+00> : vector<8xf32>
    %82 = vector.multi_reduction <add>, %79, %cst_40 [1] : vector<8x256xf32> to vector<8xf32>
    %83 = vector.shape_cast %82 : vector<8xf32> to vector<8x1xf32>
    %cst_41 = arith.constant 3.906250e-03 : f32
    %84 = vector.broadcast %cst_41 : f32 to vector<8x1xf32>
    %85 = arith.mulf %83, %84 : vector<8x1xf32>
    %86 = vector.broadcast %85 : vector<8x1xf32> to vector<8x256xf32>
    %87 = arith.subf %79, %86 : vector<8x256xf32>
    %88 = arith.mulf %87, %87 : vector<8x256xf32>
    %cst_42 = arith.constant dense<0.000000e+00> : vector<8xf32>
    %89 = vector.multi_reduction <add>, %88, %cst_42 [1] : vector<8x256xf32> to vector<8xf32>
    %90 = vector.shape_cast %89 : vector<8xf32> to vector<8x1xf32>
    %cst_43 = arith.constant 3.906250e-03 : f32
    %91 = vector.broadcast %cst_43 : f32 to vector<8x1xf32>
    %92 = arith.mulf %90, %91 : vector<8x1xf32>
    %cst_44 = arith.constant 9.99999974E-6 : f32
    %93 = vector.broadcast %cst_44 : f32 to vector<8x1xf32>
    %94 = arith.addf %92, %93 : vector<8x1xf32>
    %95 = math.rsqrt %94 : vector<8x1xf32>
    %96 = arith.mulf %95, %80 : vector<8x1xf32>
    %97 = vector.broadcast %96 : vector<8x1xf32> to vector<8x256xf32>
    %98 = arith.mulf %87, %97 : vector<8x256xf32>
    %99 = vector.broadcast %81 : vector<8x1xf32> to vector<8x256xf32>
    %100 = arith.addf %98, %99 : vector<8x256xf32>
    %101 = arith.negf %100 : vector<8x256xf32>
    %102 = math.exp %101 : vector<8x256xf32>
    %cst_45 = arith.constant 1.000000e+00 : f32
    %103 = vector.broadcast %cst_45 : f32 to vector<8x256xf32>
    %104 = arith.addf %103, %102 : vector<8x256xf32>
    %105 = arith.divf %103, %104 : vector<8x256xf32>
    %106 = arith.mulf %100, %105 : vector<8x256xf32>
    %c0_46 = arith.constant 0 : index
    %c0_47 = arith.constant 0 : index
    %107 = vector.load %arg10[%c0_46, %c0_47] : memref<8x72xf32, #tpu.memory_space<vmem>>, vector<8x72xf32>
    %c17_i32_48 = arith.constant 17 : i32
    %108 = tpu.dynamic_rotate %106 by %c17_i32_48 dim 1 : vector<8x256xf32>, i32 -> vector<8x256xf32>
    %c0_49 = arith.constant 0 : index
    %c0_50 = arith.constant 0 : index
    %c0_51 = arith.constant 0 : index
    %109 = vector.load %arg14[%c0_49, %c0_50, %c0_51] : memref<9x1x256xf32, #tpu.memory_space<vmem>>, vector<1x1x256xf32>
    %110 = vector.shape_cast %109 : vector<1x1x256xf32> to vector<1x256xf32>
    %111 = vector.broadcast %110 : vector<1x256xf32> to vector<8x256xf32>
    %112 = arith.mulf %108, %111 : vector<8x256xf32>
    %c16_i32_52 = arith.constant 16 : i32
    %113 = tpu.dynamic_rotate %106 by %c16_i32_52 dim 1 : vector<8x256xf32>, i32 -> vector<8x256xf32>
    %c1_53 = arith.constant 1 : index
    %c0_54 = arith.constant 0 : index
    %c0_55 = arith.constant 0 : index
    %114 = vector.load %arg14[%c1_53, %c0_54, %c0_55] : memref<9x1x256xf32, #tpu.memory_space<vmem>>, vector<1x1x256xf32>
    %115 = vector.shape_cast %114 : vector<1x1x256xf32> to vector<1x256xf32>
    %116 = vector.broadcast %115 : vector<1x256xf32> to vector<8x256xf32>
    %117 = arith.mulf %113, %116 : vector<8x256xf32>
    %c15_i32_56 = arith.constant 15 : i32
    %118 = tpu.dynamic_rotate %106 by %c15_i32_56 dim 1 : vector<8x256xf32>, i32 -> vector<8x256xf32>
    %c2_57 = arith.constant 2 : index
    %c0_58 = arith.constant 0 : index
    %c0_59 = arith.constant 0 : index
    %119 = vector.load %arg14[%c2_57, %c0_58, %c0_59] : memref<9x1x256xf32, #tpu.memory_space<vmem>>, vector<1x1x256xf32>
    %120 = vector.shape_cast %119 : vector<1x1x256xf32> to vector<1x256xf32>
    %121 = vector.broadcast %120 : vector<1x256xf32> to vector<8x256xf32>
    %122 = arith.mulf %118, %121 : vector<8x256xf32>
    %c1_i32_60 = arith.constant 1 : i32
    %123 = tpu.dynamic_rotate %106 by %c1_i32_60 dim 1 : vector<8x256xf32>, i32 -> vector<8x256xf32>
    %c3_61 = arith.constant 3 : index
    %c0_62 = arith.constant 0 : index
    %c0_63 = arith.constant 0 : index
    %124 = vector.load %arg14[%c3_61, %c0_62, %c0_63] : memref<9x1x256xf32, #tpu.memory_space<vmem>>, vector<1x1x256xf32>
    %125 = vector.shape_cast %124 : vector<1x1x256xf32> to vector<1x256xf32>
    %126 = vector.broadcast %125 : vector<1x256xf32> to vector<8x256xf32>
    %127 = arith.mulf %123, %126 : vector<8x256xf32>
    %c4_64 = arith.constant 4 : index
    %c0_65 = arith.constant 0 : index
    %c0_66 = arith.constant 0 : index
    %128 = vector.load %arg14[%c4_64, %c0_65, %c0_66] : memref<9x1x256xf32, #tpu.memory_space<vmem>>, vector<1x1x256xf32>
    %129 = vector.shape_cast %128 : vector<1x1x256xf32> to vector<1x256xf32>
    %130 = vector.broadcast %129 : vector<1x256xf32> to vector<8x256xf32>
    %131 = arith.mulf %106, %130 : vector<8x256xf32>
    %c255_i32_67 = arith.constant 255 : i32
    %132 = tpu.dynamic_rotate %106 by %c255_i32_67 dim 1 : vector<8x256xf32>, i32 -> vector<8x256xf32>
    %c5_68 = arith.constant 5 : index
    %c0_69 = arith.constant 0 : index
    %c0_70 = arith.constant 0 : index
    %133 = vector.load %arg14[%c5_68, %c0_69, %c0_70] : memref<9x1x256xf32, #tpu.memory_space<vmem>>, vector<1x1x256xf32>
    %134 = vector.shape_cast %133 : vector<1x1x256xf32> to vector<1x256xf32>
    %135 = vector.broadcast %134 : vector<1x256xf32> to vector<8x256xf32>
    %136 = arith.mulf %132, %135 : vector<8x256xf32>
    %c241_i32_71 = arith.constant 241 : i32
    %137 = tpu.dynamic_rotate %106 by %c241_i32_71 dim 1 : vector<8x256xf32>, i32 -> vector<8x256xf32>
    %c6_72 = arith.constant 6 : index
    %c0_73 = arith.constant 0 : index
    %c0_74 = arith.constant 0 : index
    %138 = vector.load %arg14[%c6_72, %c0_73, %c0_74] : memref<9x1x256xf32, #tpu.memory_space<vmem>>, vector<1x1x256xf32>
    %139 = vector.shape_cast %138 : vector<1x1x256xf32> to vector<1x256xf32>
    %140 = vector.broadcast %139 : vector<1x256xf32> to vector<8x256xf32>
    %141 = arith.mulf %137, %140 : vector<8x256xf32>
    %c240_i32_75 = arith.constant 240 : i32
    %142 = tpu.dynamic_rotate %106 by %c240_i32_75 dim 1 : vector<8x256xf32>, i32 -> vector<8x256xf32>
    %c7_76 = arith.constant 7 : index
    %c0_77 = arith.constant 0 : index
    %c0_78 = arith.constant 0 : index
    %143 = vector.load %arg14[%c7_76, %c0_77, %c0_78] : memref<9x1x256xf32, #tpu.memory_space<vmem>>, vector<1x1x256xf32>
    %144 = vector.shape_cast %143 : vector<1x1x256xf32> to vector<1x256xf32>
    %145 = vector.broadcast %144 : vector<1x256xf32> to vector<8x256xf32>
    %146 = arith.mulf %142, %145 : vector<8x256xf32>
    %c239_i32_79 = arith.constant 239 : i32
    %147 = tpu.dynamic_rotate %106 by %c239_i32_79 dim 1 : vector<8x256xf32>, i32 -> vector<8x256xf32>
    %c8_80 = arith.constant 8 : index
    %c0_81 = arith.constant 0 : index
    %c0_82 = arith.constant 0 : index
    %148 = vector.load %arg14[%c8_80, %c0_81, %c0_82] : memref<9x1x256xf32, #tpu.memory_space<vmem>>, vector<1x1x256xf32>
    %149 = vector.shape_cast %148 : vector<1x1x256xf32> to vector<1x256xf32>
    %150 = vector.broadcast %149 : vector<1x256xf32> to vector<8x256xf32>
    %151 = arith.mulf %147, %150 : vector<8x256xf32>
    %152 = tpu.concatenate %112, %117, %122, %127, %131, %136, %141, %146, %151 in 0 : vector<8x256xf32>, vector<8x256xf32>, vector<8x256xf32>, vector<8x256xf32>, vector<8x256xf32>, vector<8x256xf32>, vector<8x256xf32>, vector<8x256xf32>, vector<8x256xf32> -> vector<72x256xf32>
    %cst_83 = arith.constant dense<0.000000e+00> : vector<8x256xf32>
    %153 = tpu.matmul %107, %152, %cst_83 {dimension_numbers = #tpu.dot_dimension_numbers<[1], [0], [0], [1], [0, 0, 1, 1], [], []>} : vector<8x72xf32>, vector<72x256xf32>, vector<8x256xf32> -> vector<8x256xf32>
    %c0_84 = arith.constant 0 : index
    %c0_85 = arith.constant 0 : index
    %154 = vector.load %arg11[%c0_84, %c0_85] : memref<8x1xf32, #tpu.memory_space<vmem>>, vector<8x1xf32>
    %155 = vector.broadcast %154 : vector<8x1xf32> to vector<8x256xf32>
    %156 = arith.addf %153, %155 : vector<8x256xf32>
    %c0_86 = arith.constant 0 : index
    %c0_87 = arith.constant 0 : index
    %c0_88 = arith.constant 0 : index
    %157 = vector.load %arg16[%c0_86, %c0_87, %c0_88] : memref<1x8x256xf32, #tpu.memory_space<vmem>>, vector<1x8x256xf32>
    %158 = vector.shape_cast %157 : vector<1x8x256xf32> to vector<8x256xf32>
    %159 = vector.shape_cast %156 : vector<8x256xf32> to vector<1x8x256xf32>
    tpu.vector_store %arg16[%c0_86, %c0_87, %c0_88], %159 {strides = array<i32>} : memref<1x8x256xf32, #tpu.memory_space<vmem>>, vector<1x8x256xf32>,
    %c0_89 = arith.constant 0 : index
    %c0_90 = arith.constant 0 : index
    %160 = vector.load %arg12[%c0_89, %c0_90] : memref<16x72xf32, #tpu.memory_space<vmem>>, vector<16x72xf32>
    %c17_i32_91 = arith.constant 17 : i32
    %161 = tpu.dynamic_rotate %156 by %c17_i32_91 dim 1 : vector<8x256xf32>, i32 -> vector<8x256xf32>
    %c0_92 = arith.constant 0 : index
    %c0_93 = arith.constant 0 : index
    %c0_94 = arith.constant 0 : index
    %162 = vector.load %arg14[%c0_92, %c0_93, %c0_94] : memref<9x1x256xf32, #tpu.memory_space<vmem>>, vector<1x1x256xf32>
    %163 = vector.shape_cast %162 : vector<1x1x256xf32> to vector<1x256xf32>
    %164 = vector.broadcast %163 : vector<1x256xf32> to vector<8x256xf32>
    %165 = arith.mulf %161, %164 : vector<8x256xf32>
    %c16_i32_95 = arith.constant 16 : i32
    %166 = tpu.dynamic_rotate %156 by %c16_i32_95 dim 1 : vector<8x256xf32>, i32 -> vector<8x256xf32>
    %c1_96 = arith.constant 1 : index
    %c0_97 = arith.constant 0 : index
    %c0_98 = arith.constant 0 : index
    %167 = vector.load %arg14[%c1_96, %c0_97, %c0_98] : memref<9x1x256xf32, #tpu.memory_space<vmem>>, vector<1x1x256xf32>
    %168 = vector.shape_cast %167 : vector<1x1x256xf32> to vector<1x256xf32>
    %169 = vector.broadcast %168 : vector<1x256xf32> to vector<8x256xf32>
    %170 = arith.mulf %166, %169 : vector<8x256xf32>
    %c15_i32_99 = arith.constant 15 : i32
    %171 = tpu.dynamic_rotate %156 by %c15_i32_99 dim 1 : vector<8x256xf32>, i32 -> vector<8x256xf32>
    %c2_100 = arith.constant 2 : index
    %c0_101 = arith.constant 0 : index
    %c0_102 = arith.constant 0 : index
    %172 = vector.load %arg14[%c2_100, %c0_101, %c0_102] : memref<9x1x256xf32, #tpu.memory_space<vmem>>, vector<1x1x256xf32>
    %173 = vector.shape_cast %172 : vector<1x1x256xf32> to vector<1x256xf32>
    %174 = vector.broadcast %173 : vector<1x256xf32> to vector<8x256xf32>
    %175 = arith.mulf %171, %174 : vector<8x256xf32>
    %c1_i32_103 = arith.constant 1 : i32
    %176 = tpu.dynamic_rotate %156 by %c1_i32_103 dim 1 : vector<8x256xf32>, i32 -> vector<8x256xf32>
    %c3_104 = arith.constant 3 : index
    %c0_105 = arith.constant 0 : index
    %c0_106 = arith.constant 0 : index
    %177 = vector.load %arg14[%c3_104, %c0_105, %c0_106] : memref<9x1x256xf32, #tpu.memory_space<vmem>>, vector<1x1x256xf32>
    %178 = vector.shape_cast %177 : vector<1x1x256xf32> to vector<1x256xf32>
    %179 = vector.broadcast %178 : vector<1x256xf32> to vector<8x256xf32>
    %180 = arith.mulf %176, %179 : vector<8x256xf32>
    %c4_107 = arith.constant 4 : index
    %c0_108 = arith.constant 0 : index
    %c0_109 = arith.constant 0 : index
    %181 = vector.load %arg14[%c4_107, %c0_108, %c0_109] : memref<9x1x256xf32, #tpu.memory_space<vmem>>, vector<1x1x256xf32>
    %182 = vector.shape_cast %181 : vector<1x1x256xf32> to vector<1x256xf32>
    %183 = vector.broadcast %182 : vector<1x256xf32> to vector<8x256xf32>
    %184 = arith.mulf %156, %183 : vector<8x256xf32>
    %c255_i32_110 = arith.constant 255 : i32
    %185 = tpu.dynamic_rotate %156 by %c255_i32_110 dim 1 : vector<8x256xf32>, i32 -> vector<8x256xf32>
    %c5_111 = arith.constant 5 : index
    %c0_112 = arith.constant 0 : index
    %c0_113 = arith.constant 0 : index
    %186 = vector.load %arg14[%c5_111, %c0_112, %c0_113] : memref<9x1x256xf32, #tpu.memory_space<vmem>>, vector<1x1x256xf32>
    %187 = vector.shape_cast %186 : vector<1x1x256xf32> to vector<1x256xf32>
    %188 = vector.broadcast %187 : vector<1x256xf32> to vector<8x256xf32>
    %189 = arith.mulf %185, %188 : vector<8x256xf32>
    %c241_i32_114 = arith.constant 241 : i32
    %190 = tpu.dynamic_rotate %156 by %c241_i32_114 dim 1 : vector<8x256xf32>, i32 -> vector<8x256xf32>
    %c6_115 = arith.constant 6 : index
    %c0_116 = arith.constant 0 : index
    %c0_117 = arith.constant 0 : index
    %191 = vector.load %arg14[%c6_115, %c0_116, %c0_117] : memref<9x1x256xf32, #tpu.memory_space<vmem>>, vector<1x1x256xf32>
    %192 = vector.shape_cast %191 : vector<1x1x256xf32> to vector<1x256xf32>
    %193 = vector.broadcast %192 : vector<1x256xf32> to vector<8x256xf32>
    %194 = arith.mulf %190, %193 : vector<8x256xf32>
    %c240_i32_118 = arith.constant 240 : i32
    %195 = tpu.dynamic_rotate %156 by %c240_i32_118 dim 1 : vector<8x256xf32>, i32 -> vector<8x256xf32>
    %c7_119 = arith.constant 7 : index
    %c0_120 = arith.constant 0 : index
    %c0_121 = arith.constant 0 : index
    %196 = vector.load %arg14[%c7_119, %c0_120, %c0_121] : memref<9x1x256xf32, #tpu.memory_space<vmem>>, vector<1x1x256xf32>
    %197 = vector.shape_cast %196 : vector<1x1x256xf32> to vector<1x256xf32>
    %198 = vector.broadcast %197 : vector<1x256xf32> to vector<8x256xf32>
    %199 = arith.mulf %195, %198 : vector<8x256xf32>
    %c239_i32_122 = arith.constant 239 : i32
    %200 = tpu.dynamic_rotate %156 by %c239_i32_122 dim 1 : vector<8x256xf32>, i32 -> vector<8x256xf32>
    %c8_123 = arith.constant 8 : index
    %c0_124 = arith.constant 0 : index
    %c0_125 = arith.constant 0 : index
    %201 = vector.load %arg14[%c8_123, %c0_124, %c0_125] : memref<9x1x256xf32, #tpu.memory_space<vmem>>, vector<1x1x256xf32>
    %202 = vector.shape_cast %201 : vector<1x1x256xf32> to vector<1x256xf32>
    %203 = vector.broadcast %202 : vector<1x256xf32> to vector<8x256xf32>
    %204 = arith.mulf %200, %203 : vector<8x256xf32>
    %205 = tpu.concatenate %165, %170, %175, %180, %184, %189, %194, %199, %204 in 0 : vector<8x256xf32>, vector<8x256xf32>, vector<8x256xf32>, vector<8x256xf32>, vector<8x256xf32>, vector<8x256xf32>, vector<8x256xf32>, vector<8x256xf32>, vector<8x256xf32> -> vector<72x256xf32>
    %cst_126 = arith.constant dense<0.000000e+00> : vector<16x256xf32>
    %206 = tpu.matmul %160, %205, %cst_126 {dimension_numbers = #tpu.dot_dimension_numbers<[1], [0], [0], [1], [0, 0, 1, 1], [], []>} : vector<16x72xf32>, vector<72x256xf32>, vector<16x256xf32> -> vector<16x256xf32>
    %c0_127 = arith.constant 0 : index
    %c0_128 = arith.constant 0 : index
    %207 = vector.load %arg15[%c0_127, %c0_128] : memref<256x64xf32, #tpu.memory_space<vmem>>, vector<256x64xf32>
    %cst_129 = arith.constant dense<0.000000e+00> : vector<16x64xf32>
    %208 = tpu.matmul %206, %207, %cst_129 {dimension_numbers = #tpu.dot_dimension_numbers<[1], [0], [0], [1], [0, 0, 1, 1], [], []>} : vector<16x256xf32>, vector<256x64xf32>, vector<16x64xf32> -> vector<16x64xf32>
    %c0_130 = arith.constant 0 : index
    %c0_131 = arith.constant 0 : index
    %209 = vector.load %arg13[%c0_130, %c0_131] : memref<16x1xf32, #tpu.memory_space<vmem>>, vector<16x1xf32>
    %210 = vector.broadcast %209 : vector<16x1xf32> to vector<16x64xf32>
    %211 = arith.addf %208, %210 : vector<16x64xf32>
    %c0_132 = arith.constant 0 : index
    %c0_133 = arith.constant 0 : index
    %c0_134 = arith.constant 0 : index
    %212 = vector.load %arg17[%c0_132, %c0_133, %c0_134] : memref<1x16x64xf32, #tpu.memory_space<vmem>>, vector<1x16x64xf32>
    %213 = vector.shape_cast %212 : vector<1x16x64xf32> to vector<16x64xf32>
    %214 = vector.shape_cast %211 : vector<16x64xf32> to vector<1x16x64xf32>
    tpu.vector_store %arg17[%c0_132, %c0_133, %c0_134], %214 {strides = array<i32>} : memref<1x16x64xf32, #tpu.memory_space<vmem>>, vector<1x16x64xf32>,
    return
  }
  func.func @transform_0(%arg0: i32) -> (i32, i32, i32) {
    %c0_i32 = arith.constant 0 : i32
    %c0_i32_0 = arith.constant 0 : i32
    %c0_i32_1 = arith.constant 0 : i32
    return %arg0, %c0_i32, %c0_i32_0 : i32, i32, i32
  }
  func.func @transform_1(%arg0: i32) -> (i32, i32) {
    %c0_i32 = arith.constant 0 : i32
    %c0_i32_0 = arith.constant 0 : i32
    %c0_i32_1 = arith.constant 0 : i32
    return %c0_i32, %c0_i32_0 : i32, i32
  }
  func.func @transform_2(%arg0: i32) -> (i32, i32) {
    %c0_i32 = arith.constant 0 : i32
    %c0_i32_0 = arith.constant 0 : i32
    %c0_i32_1 = arith.constant 0 : i32
    return %c0_i32, %c0_i32_0 : i32, i32
  }
  func.func @transform_3(%arg0: i32) -> (i32, i32) {
    %c0_i32 = arith.constant 0 : i32
    %c0_i32_0 = arith.constant 0 : i32
    %c0_i32_1 = arith.constant 0 : i32
    return %c0_i32, %c0_i32_0 : i32, i32
  }
  func.func @transform_4(%arg0: i32) -> (i32, i32) {
    %c0_i32 = arith.constant 0 : i32
    %c0_i32_0 = arith.constant 0 : i32
    %c0_i32_1 = arith.constant 0 : i32
    return %c0_i32, %c0_i32_0 : i32, i32
  }
  func.func @transform_5(%arg0: i32) -> (i32, i32, i32) {
    %c0_i32 = arith.constant 0 : i32
    %c0_i32_0 = arith.constant 0 : i32
    %c0_i32_1 = arith.constant 0 : i32
    return %arg0, %c0_i32, %c0_i32_0 : i32, i32, i32
  }
  func.func @transform_6(%arg0: i32) -> (i32, i32) {
    %c0_i32 = arith.constant 0 : i32
    %c0_i32_0 = arith.constant 0 : i32
    %c0_i32_1 = arith.constant 0 : i32
    return %c0_i32, %c0_i32_0 : i32, i32
  }
  func.func @transform_7(%arg0: i32) -> (i32, i32) {
    %c0_i32 = arith.constant 0 : i32
    %c0_i32_0 = arith.constant 0 : i32
    %c0_i32_1 = arith.constant 0 : i32
    return %c0_i32, %c0_i32_0 : i32, i32
  }
  func.func @transform_8(%arg0: i32) -> (i32, i32) {
    %c0_i32 = arith.constant 0 : i32
    %c0_i32_0 = arith.constant 0 : i32
    %c0_i32_1 = arith.constant 0 : i32
    return %c0_i32, %c0_i32_0 : i32, i32
  }
  func.func @transform_9(%arg0: i32) -> (i32, i32) {
    %c0_i32 = arith.constant 0 : i32
    %c0_i32_0 = arith.constant 0 : i32
    %c0_i32_1 = arith.constant 0 : i32
    return %c0_i32, %c0_i32_0 : i32, i32
  }
  func.func @transform_10(%arg0: i32) -> (i32, i32) {
    %c0_i32 = arith.constant 0 : i32
    %c0_i32_0 = arith.constant 0 : i32
    %c0_i32_1 = arith.constant 0 : i32
    return %c0_i32, %c0_i32_0 : i32, i32
  }
  func.func @transform_11(%arg0: i32) -> (i32, i32) {
    %c0_i32 = arith.constant 0 : i32
    %c0_i32_0 = arith.constant 0 : i32
    %c0_i32_1 = arith.constant 0 : i32
    return %c0_i32, %c0_i32_0 : i32, i32
  }
  func.func @transform_12(%arg0: i32) -> (i32, i32) {
    %c0_i32 = arith.constant 0 : i32
    %c0_i32_0 = arith.constant 0 : i32
    %c0_i32_1 = arith.constant 0 : i32
    return %c0_i32, %c0_i32_0 : i32, i32
  }
  func.func @transform_13(%arg0: i32) -> (i32, i32, i32) {
    %c0_i32 = arith.constant 0 : i32
    %c0_i32_0 = arith.constant 0 : i32
    %c0_i32_1 = arith.constant 0 : i32
    %c0_i32_2 = arith.constant 0 : i32
    return %c0_i32, %c0_i32_0, %c0_i32_1 : i32, i32, i32
  }
  func.func @transform_14(%arg0: i32) -> (i32, i32) {
    %c0_i32 = arith.constant 0 : i32
    %c0_i32_0 = arith.constant 0 : i32
    %c0_i32_1 = arith.constant 0 : i32
    return %c0_i32, %c0_i32_0 : i32, i32
  }
  func.func @transform_15(%arg0: i32) -> (i32, i32, i32) {
    %c0_i32 = arith.constant 0 : i32
    %c0_i32_0 = arith.constant 0 : i32
    %c0_i32_1 = arith.constant 0 : i32
    return %arg0, %c0_i32, %c0_i32_0 : i32, i32, i32
  }
  func.func @transform_16(%arg0: i32) -> (i32, i32, i32) {
    %c0_i32 = arith.constant 0 : i32
    %c0_i32_0 = arith.constant 0 : i32
    %c0_i32_1 = arith.constant 0 : i32
    return %arg0, %c0_i32, %c0_i32_0 : i32, i32, i32
  }
}

</mosaic_0001>

<llo_original>
// kernel: _down_block_impl.1
$region0: #{_down_block_impl.1}
  #allocation0 [shape = 'u32[]', space=smem, size = 0x4, offset = 0x4, fixed_abs, tag = 'smem constant byte address 0x4 - core index']
  #allocation1 [shape = 'u32[144,128]{1,0:T(1,128)}', space=vmem, size = 0x12000, scoped, tag = 'internal scratch']
  %s0 = inlined_call_operand.vmem [shape: f32[2,8,256], index: 0, kind: input, shape index: {}]
  %s1 = inlined_call_operand.vmem [shape: f32[8,8], index: 1, kind: input, shape index: {}, may-alias: {1,6}]
  %s2 = inlined_call_operand.vmem [shape: f32[8,1], index: 2, kind: input, shape index: {}]
  %s3 = inlined_call_operand.vmem [shape: f32[8,1], index: 3, kind: input, shape index: {}]
  %s4 = inlined_call_operand.vmem [shape: f32[8,72], index: 4, kind: input, shape index: {}]
  %s5 = inlined_call_operand.vmem [shape: f32[2,8,1], index: 5, kind: input, shape index: {}]
  %s6 = inlined_call_operand.vmem [shape: f32[8,8], index: 6, kind: input, shape index: {}, may-alias: {1,6}]
  %s7 = inlined_call_operand.vmem [shape: f32[8,1], index: 7, kind: input, shape index: {}]
  %s8 = inlined_call_operand.vmem [shape: f32[8,1], index: 8, kind: input, shape index: {}]
  %s9 = inlined_call_operand.vmem [shape: f32[8,72], index: 9, kind: input, shape index: {}]
  %s10 = inlined_call_operand.vmem [shape: f32[8,1], index: 10, kind: input, shape index: {}]
  %s11 = inlined_call_operand.vmem [shape: f32[16,72], index: 11, kind: input, shape index: {}]
  %s12 = inlined_call_operand.vmem [shape: f32[16,1], index: 12, kind: input, shape index: {}]
  %s13 = inlined_call_operand.vmem [shape: f32[9,1,256], index: 13, kind: input, shape index: {}]
  %s14 = inlined_call_operand.vmem [shape: f32[256,64], index: 14, kind: input, shape index: {}]
  %s15 = inlined_call_operand.vmem [shape: f32[2,8,256], index: 15, kind: output, shape index: {0}]
  %s16 = inlined_call_operand.vmem [shape: f32[2,16,64], index: 16, kind: output, shape index: {1}]
  %17 = xla_tuple %s15, %s16
  %s18 = sld [smem:[#allocation0]]
  $region101: #{_down_block_impl.1} parent=0
    _
  %s20 = ssub.s32 1, %s18
  %s21 = scalar_select 0, %s20, %s18
  loop: start=0, step=1, limit=4
  $region2: #{_down_block_impl.1} parent=0 // loop_pre_header
    _
  $region3: #{_down_block_impl.1} parent=0 // loop_header
    %s23 = sphi 0, %s27
    %p24 = scmp.ge.s32.totalorder %s23, 4
    %s33 = sphi 0, %s35
    %s36 = sphi 0, %s33
    %s37 = sphi 0, %s36
    %s53 = sphi 0, %s37
    %s57 = sphi 0, %s57
    %s59 = sphi 0, %s57
    %s60 = sphi 0, %s59
    %s74 = sphi 0, %s60
    %s78 = sphi 0, %s78
    %s80 = sphi 0, %s78
    %s81 = sphi 0, %s80
    %s95 = sphi 0, %s81
    %s99 = sphi 0, %s99
    %s101 = sphi 0, %s99
    %s102 = sphi 0, %s101
    %s116 = sphi 0, %s102
    %s120 = sphi 0, %s120
    %s122 = sphi 0, %s120
    %s123 = sphi 0, %s122
    %s137 = sphi 0, %s123
    %s143 = sphi 0, %s145
    %s146 = sphi 0, %s143
    %s147 = sphi 0, %s146
    %s163 = sphi 0, %s147
    %s167 = sphi 0, %s167
    %s169 = sphi 0, %s167
    %s170 = sphi 0, %s169
    %s184 = sphi 0, %s170
    %s188 = sphi 0, %s188
    %s190 = sphi 0, %s188
    %s191 = sphi 0, %s190
    %s205 = sphi 0, %s191
    %s209 = sphi 0, %s209
    %s211 = sphi 0, %s209
    %s212 = sphi 0, %s211
    %s226 = sphi 0, %s212
    %s230 = sphi 0, %s230
    %s232 = sphi 0, %s230
    %s233 = sphi 0, %s232
    %s247 = sphi 0, %s233
    %s251 = sphi 0, %s251
    %s253 = sphi 0, %s251
    %s254 = sphi 0, %s253
    %s268 = sphi 0, %s254
    %s272 = sphi 0, %s272
    %s274 = sphi 0, %s272
    %s275 = sphi 0, %s274
    %s289 = sphi 0, %s275
    %s293 = sphi 0, %s293
    %s295 = sphi 0, %s293
    %s296 = sphi 0, %s295
    %s310 = sphi 0, %s296
    %s314 = sphi 0, %s314
    %s316 = sphi 0, %s314
    %s317 = sphi 0, %s316
    %s331 = sphi 0, %s317
    %s335 = sphi 0, %s335
    %s337 = sphi 0, %s335
    %s338 = sphi 0, %s337
    %s352 = sphi 0, %s338
    %s358 = sphi 0, %s360
    %s361 = sphi 0, %s358
    %s362 = sphi 0, %s361
    %s378 = sphi 0, %s362
    %s384 = sphi 0, %s386
    %s387 = sphi 0, %s384
    %s388 = sphi 0, %s387
    %s404 = sphi 0, %s388
  $region4: #{_down_block_impl.1} parent=0 // loop_header_branch
    %26 = sbr.rel (%p24) target = $region8
  $region5: #{_down_block_impl.1} parent=0 // loop_body
    %s28 = ssub.s32 %s23, 1
    %s29 = ssub.s32 %s23, 2
    %s30 = sadd.s32 %s23, 1
    %s31 = ssub.s32 %s23, %s30
    %p32 = scmp.eq.s32.totalorder %s31, 0
    %s34 = sadd.s32 %s33, 1
    %s35 = scalar_select %p32, %s33, %s34
    %p38 = pneg %p32
    %p39 = scmp.eq.s32.totalorder %s23, 1
    %p40 = por %p38, %p39
    %p41 = scmp.ne.s32.totalorder %s33, %s36
    %p42 = scmp.eq.s32.totalorder %s23, 0
    %p43 = por %p41, %p42
    %p44 = scmp.ne.s32.totalorder %s33, %s36
    %p45 = scmp.eq.s32.totalorder %s28, 1
    %p46 = por %p44, %p45
    %p47 = scmp.ne.s32.totalorder %s36, %s37
    %p48 = scmp.eq.s32.totalorder %s28, 0
    %p49 = por %p47, %p48
    %p50 = scmp.ne.s32.totalorder %s36, %s37
    %p51 = scmp.eq.s32.totalorder %s29, 1
    %p52 = por %p50, %p51
    %p54 = scmp.ne.s32.totalorder %s37, %s53
    %p55 = scmp.eq.s32.totalorder %s29, 0
    %p56 = por %p54, %p55
    %s58 = sadd.s32 %s57, 1
    %p61 = scmp.eq.s32.totalorder %s23, 1
    %p62 = scmp.ne.s32.totalorder %s57, %s59
    %p63 = scmp.eq.s32.totalorder %s23, 0
    %p64 = por %p62, %p63
    %p65 = scmp.ne.s32.totalorder %s57, %s59
    %p66 = scmp.eq.s32.totalorder %s28, 1
    %p67 = por %p65, %p66
    %p68 = scmp.ne.s32.totalorder %s59, %s60
    %p69 = scmp.eq.s32.totalorder %s28, 0
    %p70 = por %p68, %p69
    %p71 = scmp.ne.s32.totalorder %s59, %s60
    %p72 = scmp.eq.s32.totalorder %s29, 1
    %p73 = por %p71, %p72
    %p75 = scmp.ne.s32.totalorder %s60, %s74
    %p76 = scmp.eq.s32.totalorder %s29, 0
    %p77 = por %p75, %p76
    %s79 = sadd.s32 %s78, 1
    %p82 = scmp.eq.s32.totalorder %s23, 1
    %p83 = scmp.ne.s32.totalorder %s78, %s80
    %p84 = scmp.eq.s32.totalorder %s23, 0
    %p85 = por %p83, %p84
    %p86 = scmp.ne.s32.totalorder %s78, %s80
    %p87 = scmp.eq.s32.totalorder %s28, 1
    %p88 = por %p86, %p87
    %p89 = scmp.ne.s32.totalorder %s80, %s81
    %p90 = scmp.eq.s32.totalorder %s28, 0
    %p91 = por %p89, %p90
    %p92 = scmp.ne.s32.totalorder %s80, %s81
    %p93 = scmp.eq.s32.totalorder %s29, 1
    %p94 = por %p92, %p93
    %p96 = scmp.ne.s32.totalorder %s81, %s95
    %p97 = scmp.eq.s32.totalorder %s29, 0
    %p98 = por %p96, %p97
    %s100 = sadd.s32 %s99, 1
    %p103 = scmp.eq.s32.totalorder %s23, 1
    %p104 = scmp.ne.s32.totalorder %s99, %s101
    %p105 = scmp.eq.s32.totalorder %s23, 0
    %p106 = por %p104, %p105
    %p107 = scmp.ne.s32.totalorder %s99, %s101
    %p108 = scmp.eq.s32.totalorder %s28, 1
    %p109 = por %p107, %p108
    %p110 = scmp.ne.s32.totalorder %s101, %s102
    %p111 = scmp.eq.s32.totalorder %s28, 0
    %p112 = por %p110, %p111
    %p113 = scmp.ne.s32.totalorder %s101, %s102
    %p114 = scmp.eq.s32.totalorder %s29, 1
    %p115 = por %p113, %p114
    %p117 = scmp.ne.s32.totalorder %s102, %s116
    %p118 = scmp.eq.s32.totalorder %s29, 0
    %p119 = por %p117, %p118
    %s121 = sadd.s32 %s120, 1
    %p124 = scmp.eq.s32.totalorder %s23, 1
    %p125 = scmp.ne.s32.totalorder %s120, %s122
    %p126 = scmp.eq.s32.totalorder %s23, 0
    %p127 = por %p125, %p126
    %p128 = scmp.ne.s32.totalorder %s120, %s122
    %p129 = scmp.eq.s32.totalorder %s28, 1
    %p130 = por %p128, %p129
    %p131 = scmp.ne.s32.totalorder %s122, %s123
    %p132 = scmp.eq.s32.totalorder %s28, 0
    %p133 = por %p131, %p132
    %p134 = scmp.ne.s32.totalorder %s122, %s123
    %p135 = scmp.eq.s32.totalorder %s29, 1
    %p136 = por %p134, %p135
    %p138 = scmp.ne.s32.totalorder %s123, %s137
    %p139 = scmp.eq.s32.totalorder %s29, 0
    %p140 = por %p138, %p139
    %s141 = ssub.s32 %s23, %s30
    %p142 = scmp.eq.s32.totalorder %s141, 0
    %s144 = sadd.s32 %s143, 1
    %s145 = scalar_select %p142, %s143, %s144
    %p148 = pneg %p142
    %p149 = scmp.eq.s32.totalorder %s23, 1
    %p150 = por %p148, %p149
    %p151 = scmp.ne.s32.totalorder %s143, %s146
    %p152 = scmp.eq.s32.totalorder %s23, 0
    %p153 = por %p151, %p152
    %p154 = scmp.ne.s32.totalorder %s143, %s146
    %p155 = scmp.eq.s32.totalorder %s28, 1
    %p156 = por %p154, %p155
    %p157 = scmp.ne.s32.totalorder %s146, %s147
    %p158 = scmp.eq.s32.totalorder %s28, 0
    %p159 = por %p157, %p158
    %p160 = scmp.ne.s32.totalorder %s146, %s147
    %p161 = scmp.eq.s32.totalorder %s29, 1
    %p162 = por %p160, %p161
    %p164 = scmp.ne.s32.totalorder %s147, %s163
    %p165 = scmp.eq.s32.totalorder %s29, 0
    %p166 = por %p164, %p165
    %s168 = sadd.s32 %s167, 1
    %p171 = scmp.eq.s32.totalorder %s23, 1
    %p172 = scmp.ne.s32.totalorder %s167, %s169
    %p173 = scmp.eq.s32.totalorder %s23, 0
    %p174 = por %p172, %p173
    %p175 = scmp.ne.s32.totalorder %s167, %s169
    %p176 = scmp.eq.s32.totalorder %s28, 1
    %p177 = por %p175, %p176
    %p178 = scmp.ne.s32.totalorder %s169, %s170
    %p179 = scmp.eq.s32.totalorder %s28, 0
    %p180 = por %p178, %p179
    %p181 = scmp.ne.s32.totalorder %s169, %s170
    %p182 = scmp.eq.s32.totalorder %s29, 1
    %p183 = por %p181, %p182
    %p185 = scmp.ne.s32.totalorder %s170, %s184
    %p186 = scmp.eq.s32.totalorder %s29, 0
    %p187 = por %p185, %p186
    %s189 = sadd.s32 %s188, 1
    %p192 = scmp.eq.s32.totalorder %s23, 1
    %p193 = scmp.ne.s32.totalorder %s188, %s190
    %p194 = scmp.eq.s32.totalorder %s23, 0
    %p195 = por %p193, %p194
    %p196 = scmp.ne.s32.totalorder %s188, %s190
    %p197 = scmp.eq.s32.totalorder %s28, 1
    %p198 = por %p196, %p197
    %p199 = scmp.ne.s32.totalorder %s190, %s191
    %p200 = scmp.eq.s32.totalorder %s28, 0
    %p201 = por %p199, %p200
    %p202 = scmp.ne.s32.totalorder %s190, %s191
    %p203 = scmp.eq.s32.totalorder %s29, 1
    %p204 = por %p202, %p203
    %p206 = scmp.ne.s32.totalorder %s191, %s205
    %p207 = scmp.eq.s32.totalorder %s29, 0
    %p208 = por %p206, %p207
    %s210 = sadd.s32 %s209, 1
    %p213 = scmp.eq.s32.totalorder %s23, 1
    %p214 = scmp.ne.s32.totalorder %s209, %s211
    %p215 = scmp.eq.s32.totalorder %s23, 0
    %p216 = por %p214, %p215
    %p217 = scmp.ne.s32.totalorder %s209, %s211
    %p218 = scmp.eq.s32.totalorder %s28, 1
    %p219 = por %p217, %p218
    %p220 = scmp.ne.s32.totalorder %s211, %s212
    %p221 = scmp.eq.s32.totalorder %s28, 0
    %p222 = por %p220, %p221
    %p223 = scmp.ne.s32.totalorder %s211, %s212
    %p224 = scmp.eq.s32.totalorder %s29, 1
    %p225 = por %p223, %p224
    %p227 = scmp.ne.s32.totalorder %s212, %s226
    %p228 = scmp.eq.s32.totalorder %s29, 0
    %p229 = por %p227, %p228
    %s231 = sadd.s32 %s230, 1
    %p234 = scmp.eq.s32.totalorder %s23, 1
    %p235 = scmp.ne.s32.totalorder %s230, %s232
    %p236 = scmp.eq.s32.totalorder %s23, 0
    %p237 = por %p235, %p236
    %p238 = scmp.ne.s32.totalorder %s230, %s232
    %p239 = scmp.eq.s32.totalorder %s28, 1
    %p240 = por %p238, %p239
    %p241 = scmp.ne.s32.totalorder %s232, %s233
    %p242 = scmp.eq.s32.totalorder %s28, 0
    %p243 = por %p241, %p242
    %p244 = scmp.ne.s32.totalorder %s232, %s233
    %p245 = scmp.eq.s32.totalorder %s29, 1
    %p246 = por %p244, %p245
    %p248 = scmp.ne.s32.totalorder %s233, %s247
    %p249 = scmp.eq.s32.totalorder %s29, 0
    %p250 = por %p248, %p249
    %s252 = sadd.s32 %s251, 1
    %p255 = scmp.eq.s32.totalorder %s23, 1
    %p256 = scmp.ne.s32.totalorder %s251, %s253
    %p257 = scmp.eq.s32.totalorder %s23, 0
    %p258 = por %p256, %p257
    %p259 = scmp.ne.s32.totalorder %s251, %s253
    %p260 = scmp.eq.s32.totalorder %s28, 1
    %p261 = por %p259, %p260
    %p262 = scmp.ne.s32.totalorder %s253, %s254
    %p263 = scmp.eq.s32.totalorder %s28, 0
    %p264 = por %p262, %p263
    %p265 = scmp.ne.s32.totalorder %s253, %s254
    %p266 = scmp.eq.s32.totalorder %s29, 1
    %p267 = por %p265, %p266
    %p269 = scmp.ne.s32.totalorder %s254, %s268
    %p270 = scmp.eq.s32.totalorder %s29, 0
    %p271 = por %p269, %p270
    %s273 = sadd.s32 %s272, 1
    %p276 = scmp.eq.s32.totalorder %s23, 1
    %p277 = scmp.ne.s32.totalorder %s272, %s274
    %p278 = scmp.eq.s32.totalorder %s23, 0
    %p279 = por %p277, %p278
    %p280 = scmp.ne.s32.totalorder %s272, %s274
    %p281 = scmp.eq.s32.totalorder %s28, 1
    %p282 = por %p280, %p281
    %p283 = scmp.ne.s32.totalorder %s274, %s275
    %p284 = scmp.eq.s32.totalorder %s28, 0
    %p285 = por %p283, %p284
    %p286 = scmp.ne.s32.totalorder %s274, %s275
    %p287 = scmp.eq.s32.totalorder %s29, 1
    %p288 = por %p286, %p287
    %p290 = scmp.ne.s32.totalorder %s275, %s289
    %p291 = scmp.eq.s32.totalorder %s29, 0
    %p292 = por %p290, %p291
    %s294 = sadd.s32 %s293, 1
    %p297 = scmp.eq.s32.totalorder %s23, 1
    %p298 = scmp.ne.s32.totalorder %s293, %s295
    %p299 = scmp.eq.s32.totalorder %s23, 0
    %p300 = por %p298, %p299
    %p301 = scmp.ne.s32.totalorder %s293, %s295
    %p302 = scmp.eq.s32.totalorder %s28, 1
    %p303 = por %p301, %p302
    %p304 = scmp.ne.s32.totalorder %s295, %s296
    %p305 = scmp.eq.s32.totalorder %s28, 0
    %p306 = por %p304, %p305
    %p307 = scmp.ne.s32.totalorder %s295, %s296
    %p308 = scmp.eq.s32.totalorder %s29, 1
    %p309 = por %p307, %p308
    %p311 = scmp.ne.s32.totalorder %s296, %s310
    %p312 = scmp.eq.s32.totalorder %s29, 0
    %p313 = por %p311, %p312
    %s315 = sadd.s32 %s314, 1
    %p318 = scmp.eq.s32.totalorder %s23, 1
    %p319 = scmp.ne.s32.totalorder %s314, %s316
    %p320 = scmp.eq.s32.totalorder %s23, 0
    %p321 = por %p319, %p320
    %p322 = scmp.ne.s32.totalorder %s314, %s316
    %p323 = scmp.eq.s32.totalorder %s28, 1
    %p324 = por %p322, %p323
    %p325 = scmp.ne.s32.totalorder %s316, %s317
    %p326 = scmp.eq.s32.totalorder %s28, 0
    %p327 = por %p325, %p326
    %p328 = scmp.ne.s32.totalorder %s316, %s317
    %p329 = scmp.eq.s32.totalorder %s29, 1
    %p330 = por %p328, %p329
    %p332 = scmp.ne.s32.totalorder %s317, %s331
    %p333 = scmp.eq.s32.totalorder %s29, 0
    %p334 = por %p332, %p333
    %s336 = sadd.s32 %s335, 1
    %p339 = scmp.eq.s32.totalorder %s23, 1
    %p340 = scmp.ne.s32.totalorder %s335, %s337
    %p341 = scmp.eq.s32.totalorder %s23, 0
    %p342 = por %p340, %p341
    %p343 = scmp.ne.s32.totalorder %s335, %s337
    %p344 = scmp.eq.s32.totalorder %s28, 1
    %p345 = por %p343, %p344
    %p346 = scmp.ne.s32.totalorder %s337, %s338
    %p347 = scmp.eq.s32.totalorder %s28, 0
    %p348 = por %p346, %p347
    %p349 = scmp.ne.s32.totalorder %s337, %s338
    %p350 = scmp.eq.s32.totalorder %s29, 1
    %p351 = por %p349, %p350
    %p353 = scmp.ne.s32.totalorder %s338, %s352
    %p354 = scmp.eq.s32.totalorder %s29, 0
    %p355 = por %p353, %p354
    %s356 = ssub.s32 %s23, %s30
    %p357 = scmp.eq.s32.totalorder %s356, 0
    %s359 = sadd.s32 %s358, 1
    %s360 = scalar_select %p357, %s358, %s359
    %p363 = pneg %p357
    %p364 = scmp.eq.s32.totalorder %s23, 1
    %p365 = por %p363, %p364
    %p366 = scmp.ne.s32.totalorder %s358, %s361
    %p367 = scmp.eq.s32.totalorder %s23, 0
    %p368 = por %p366, %p367
    %p369 = scmp.ne.s32.totalorder %s358, %s361
    %p370 = scmp.eq.s32.totalorder %s28, 1
    %p371 = por %p369, %p370
    %p372 = scmp.ne.s32.totalorder %s361, %s362
    %p373 = scmp.eq.s32.totalorder %s28, 0
    %p374 = por %p372, %p373
    %p375 = scmp.ne.s32.totalorder %s361, %s362
    %p376 = scmp.eq.s32.totalorder %s29, 1
    %p377 = por %p375, %p376
    %p379 = scmp.ne.s32.totalorder %s362, %s378
    %p380 = scmp.eq.s32.totalorder %s29, 0
    %p381 = por %p379, %p380
    %s382 = ssub.s32 %s23, %s30
    %p383 = scmp.eq.s32.totalorder %s382, 0
    %s385 = sadd.s32 %s384, 1
    %s386 = scalar_select %p383, %s384, %s385
    %p389 = pneg %p383
    %p390 = scmp.eq.s32.totalorder %s23, 1
    %p391 = por %p389, %p390
    %p392 = scmp.ne.s32.totalorder %s384, %s387
    %p393 = scmp.eq.s32.totalorder %s23, 0
    %p394 = por %p392, %p393
    %p395 = scmp.ne.s32.totalorder %s384, %s387
    %p396 = scmp.eq.s32.totalorder %s28, 1
    %p397 = por %p395, %p396
    %p398 = scmp.ne.s32.totalorder %s387, %s388
    %p399 = scmp.eq.s32.totalorder %s28, 0
    %p400 = por %p398, %p399
    %p401 = scmp.ne.s32.totalorder %s387, %s388
    %p402 = scmp.eq.s32.totalorder %s29, 1
    %p403 = por %p401, %p402
    %p405 = scmp.ne.s32.totalorder %s388, %s404
    %p406 = scmp.eq.s32.totalorder %s29, 0
    %p407 = por %p405, %p406
    %p408 = scmp.le.s32.totalorder 1, %s23
    %p409 = scmp.lt.s32.totalorder %s23, 3
    %p410 = pnand %p408, %p409
    %p411 = pneg %p410
    // Predicated region
    $region9: #{_down_block_impl.1} parent=5 // pred_check
      _
    $region10: #{_down_block_impl.1} parent=5 // pred_check_branch
      %413 = sbr.rel (%p410) target = $region12
    $region11: #{_down_block_impl.1} parent=5 // pred_region
      %s414 = ssub.s32 %s23, 1
      // Predicated region
      $region13: #{_down_block_impl.1} parent=11 // pred_check
        %p415 = pneg %p70
      $region14: #{_down_block_impl.1} parent=11 // pred_check_branch
        %417 = sbr.rel (%p415) target = $region16
      $region15: #{_down_block_impl.1} parent=11 // pred_region
        _
      $region16: #{_down_block_impl.1} parent=11 // pred_fallthru
        _
      // Predicated region
      $region17: #{_down_block_impl.1} parent=11 // pred_check
        %p418 = pneg %p91
      $region18: #{_down_block_impl.1} parent=11 // pred_check_branch
        %420 = sbr.rel (%p418) target = $region20
      $region19: #{_down_block_impl.1} parent=11 // pred_region
        _
      $region20: #{_down_block_impl.1} parent=11 // pred_fallthru
        _
      // Predicated region
      $region21: #{_down_block_impl.1} parent=11 // pred_check
        %p421 = pneg %p112
      $region22: #{_down_block_impl.1} parent=11 // pred_check_branch
        %423 = sbr.rel (%p421) target = $region24
      $region23: #{_down_block_impl.1} parent=11 // pred_region
        _
      $region24: #{_down_block_impl.1} parent=11 // pred_fallthru
        _
      // Predicated region
      $region25: #{_down_block_impl.1} parent=11 // pred_check
        %p424 = pneg %p133
      $region26: #{_down_block_impl.1} parent=11 // pred_check_branch
        %426 = sbr.rel (%p424) target = $region28
      $region27: #{_down_block_impl.1} parent=11 // pred_region
        _
      $region28: #{_down_block_impl.1} parent=11 // pred_fallthru
        _
      // Predicated region
      $region29: #{_down_block_impl.1} parent=11 // pred_check
        %p427 = pneg %p180
      $region30: #{_down_block_impl.1} parent=11 // pred_check_branch
        %429 = sbr.rel (%p427) target = $region32
      $region31: #{_down_block_impl.1} parent=11 // pred_region
        _
      $region32: #{_down_block_impl.1} parent=11 // pred_fallthru
        _
      // Predicated region
      $region33: #{_down_block_impl.1} parent=11 // pred_check
        %p430 = pneg %p201
      $region34: #{_down_block_impl.1} parent=11 // pred_check_branch
        %432 = sbr.rel (%p430) target = $region36
      $region35: #{_down_block_impl.1} parent=11 // pred_region
        _
      $region36: #{_down_block_impl.1} parent=11 // pred_fallthru
        _
      // Predicated region
      $region37: #{_down_block_impl.1} parent=11 // pred_check
        %p433 = pneg %p222
      $region38: #{_down_block_impl.1} parent=11 // pred_check_branch
        %435 = sbr.rel (%p433) target = $region40
      $region39: #{_down_block_impl.1} parent=11 // pred_region
        _
      $region40: #{_down_block_impl.1} parent=11 // pred_fallthru
        _
      // Predicated region
      $region41: #{_down_block_impl.1} parent=11 // pred_check
        %p436 = pneg %p243
      $region42: #{_down_block_impl.1} parent=11 // pred_check_branch
        %438 = sbr.rel (%p436) target = $region44
      $region43: #{_down_block_impl.1} parent=11 // pred_region
        _
      $region44: #{_down_block_impl.1} parent=11 // pred_fallthru
        _
      // Predicated region
      $region45: #{_down_block_impl.1} parent=11 // pred_check
        %p439 = pneg %p264
      $region46: #{_down_block_impl.1} parent=11 // pred_check_branch
        %441 = sbr.rel (%p439) target = $region48
      $region47: #{_down_block_impl.1} parent=11 // pred_region
        _
      $region48: #{_down_block_impl.1} parent=11 // pred_fallthru
        _
      // Predicated region
      $region49: #{_down_block_impl.1} parent=11 // pred_check
        %p442 = pneg %p285
      $region50: #{_down_block_impl.1} parent=11 // pred_check_branch
        %444 = sbr.rel (%p442) target = $region52
      $region51: #{_down_block_impl.1} parent=11 // pred_region
        _
      $region52: #{_down_block_impl.1} parent=11 // pred_fallthru
        _
      // Predicated region
      $region53: #{_down_block_impl.1} parent=11 // pred_check
        %p445 = pneg %p306
      $region54: #{_down_block_impl.1} parent=11 // pred_check_branch
        %447 = sbr.rel (%p445) target = $region56
      $region55: #{_down_block_impl.1} parent=11 // pred_region
        _
      $region56: #{_down_block_impl.1} parent=11 // pred_fallthru
        _
      // Predicated region
      $region57: #{_down_block_impl.1} parent=11 // pred_check
        %p448 = pneg %p327
      $region58: #{_down_block_impl.1} parent=11 // pred_check_branch
        %450 = sbr.rel (%p448) target = $region60
      $region59: #{_down_block_impl.1} parent=11 // pred_region
        _
      $region60: #{_down_block_impl.1} parent=11 // pred_fallthru
        _
      // Predicated region
      $region61: #{_down_block_impl.1} parent=11 // pred_check
        %p451 = pneg %p348
      $region62: #{_down_block_impl.1} parent=11 // pred_check_branch
        %453 = sbr.rel (%p451) target = $region64
      $region63: #{_down_block_impl.1} parent=11 // pred_region
        _
      $region64: #{_down_block_impl.1} parent=11 // pred_fallthru
        _
    $region12: #{_down_block_impl.1} parent=5 // pred_fallthru
      _
    %p454 = scmp.lt.s32.totalorder %s23, 2
    // Predicated region
    $region65: #{_down_block_impl.1} parent=5 // pred_check
      %p455 = pneg %p454
    $region66: #{_down_block_impl.1} parent=5 // pred_check_branch
      %457 = sbr.rel (%p455) target = $region68
    $region67: #{_down_block_impl.1} parent=5 // pred_region
      // Predicated region
      $region69: #{_down_block_impl.1} parent=67 // pred_check
        %p458 = pneg %p43
      $region70: #{_down_block_impl.1} parent=67 // pred_check_branch
        %460 = sbr.rel (%p458) target = $region72
      $region71: #{_down_block_impl.1} parent=67 // pred_region
        %p461 = scmp.lt.s32.totalorder %s23, 1
        %s462 = scalar_select %p461, %s23, 1
        %s463 = smul.addr %s462, 2
        %s464 = smul.addr %s463, 8
        %s465 = scalar_lea.vmem %s0, %s464
      $region72: #{_down_block_impl.1} parent=67 // pred_fallthru
        _
      // Predicated region
      $region73: #{_down_block_impl.1} parent=67 // pred_check
        %p466 = pneg %p153
      $region74: #{_down_block_impl.1} parent=67 // pred_check_branch
        %468 = sbr.rel (%p466) target = $region76
      $region75: #{_down_block_impl.1} parent=67 // pred_region
        %p469 = scmp.lt.s32.totalorder %s23, 1
        %s470 = scalar_select %p469, %s23, 1
        %s471 = smul.addr %s470, 8
        %s472 = scalar_lea.vmem %s5, %s471
      $region76: #{_down_block_impl.1} parent=67 // pred_fallthru
        _
    $region68: #{_down_block_impl.1} parent=5 // pred_fallthru
      _
    %p473 = scmp.le.s32.totalorder 1, %s23
    %p474 = scmp.lt.s32.totalorder %s23, 3
    %p475 = pnand %p473, %p474
    %p476 = pneg %p475
    // Predicated region
    $region77: #{_down_block_impl.1} parent=5 // pred_check
      _
    $region78: #{_down_block_impl.1} parent=5 // pred_check_branch
      %478 = sbr.rel (%p475) target = $region80
    $region79: #{_down_block_impl.1} parent=5 // pred_region
      %s479 = ssub.s32 %s23, 1
      %p480 = scmp.lt.s32.totalorder %s28, 1
      %s481 = scalar_select %p480, %s28, 1
      %s482 = smul.addr %s481, 2
      %s483 = smul.addr %s482, 8
      %s484 = scalar_lea.vmem %s0, %s483
      %p485 = pneg %p49
      %p486 = pneg %p46
      %p487 = pneg %p70
      %p488 = pneg %p67
      %p489 = pneg %p91
      %p490 = pneg %p88
      %p491 = pneg %p112
      %p492 = pneg %p109
      %p493 = pneg %p133
      %p494 = pneg %p130
      %p495 = scmp.lt.s32.totalorder %s28, 1
      %s496 = scalar_select %p495, %s28, 1
      %s497 = smul.addr %s496, 8
      %s498 = scalar_lea.vmem %s5, %s497
      %p499 = pneg %p159
      %p500 = pneg %p156
      %p501 = pneg %p180
      %p502 = pneg %p177
      %p503 = pneg %p201
      %p504 = pneg %p198
      %p505 = pneg %p222
      %p506 = pneg %p219
      %p507 = pneg %p243
      %p508 = pneg %p240
      %p509 = pneg %p264
      %p510 = pneg %p261
      %p511 = pneg %p285
      %p512 = pneg %p282
      %p513 = pneg %p306
      %p514 = pneg %p303
      %p515 = pneg %p327
      %p516 = pneg %p324
      %p517 = pneg %p348
      %p518 = pneg %p345
      %p519 = pneg %p374
      %p520 = pneg %p371
      %p521 = scmp.lt.s32.totalorder %s28, 1
      %s522 = scalar_select %p521, %s28, 1
      %s523 = smul.addr %s522, 2
      %s524 = smul.addr %s523, 8
      %s525 = scalar_lea.vmem %s15, %s524
      %p526 = pneg %p400
      %p527 = pneg %p397
      %p528 = scmp.lt.s32.totalorder %s28, 1
      %s529 = scalar_select %p528, %s28, 1
      %s530 = smul.addr %s529, 2
      %s531 = smul.addr %s530, 8
      %s532 = scalar_lea.vmem %s16, %s531
      %p533 = scmp.lt.s32.totalorder %s28, 1
      %s534 = scalar_select %p533, %s28, 1
      %s535 = smul.addr %s534, 2
      %s536 = smul.addr %s535, 8
      %s537 = scalar_lea.vmem %s0, %s536
      %p538 = scmp.lt.s32.totalorder %s28, 1
      %s539 = scalar_select %p538, %s28, 1
      %s540 = smul.addr %s539, 8
      %s541 = scalar_lea.vmem %s5, %s540
      %p542 = scmp.lt.s32.totalorder %s28, 1
      %s543 = scalar_select %p542, %s28, 1
      %s544 = smul.addr %s543, 2
      %s545 = smul.addr %s544, 8
      %s546 = scalar_lea.vmem %s15, %s545
      %p547 = scmp.lt.s32.totalorder %s28, 1
      %s548 = scalar_select %p547, %s28, 1
      %s549 = smul.addr %s548, 2
      %s550 = smul.addr %s549, 8
      %s551 = scalar_lea.vmem %s16, %s550
      %v552 = vld [vmem:[%s537] sm:$0xff]
      %v553 = vld [vmem:[%s537 + $0x8] sm:$0xff]
      %v554 = vld [vmem:[%s2] sm:$0xff]
      %v555 = vld [vmem:[%s3] sm:$0xff]
      %v556 = vadd.f32 %v552, %v553
      %557 = vadd.xlane.f32.xlu0 %v556
      %v558 = vpop.xlane.xlu0 %557
      %v559 = vmul.f32 %v558, 0.00390625
      %v560 = vsub.f32 %v552, %v559
      %v561 = vsub.f32 %v553, %v559
      %v562 = vmul.f32 %v560, %v560
      %v563 = vmul.f32 %v561, %v561
      %v564 = vadd.f32 %v562, %v563
      %565 = vadd.xlane.f32.xlu0 %v564
      %v566 = vpop.xlane.xlu0 %565
      %v567 = vmul.f32 %v566, 0.00390625
      %v568 = vadd.f32 %v567, 1e-05
      %v569 = vrsqrt.pop %v568
      %v570 = vmul.f32 %v569, %v554
      %572 = vset.pattern.permute.xlu0 0
      %573 = vperm.xlu0 %572, %v570
      %v574 = vpop.permute.xlu0 %573
      %v576 = vmul.f32 %v560, %v574
      %v577 = vmul.f32 %v561, %v574
      %579 = vset.pattern.permute.xlu0 0
      %580 = vperm.xlu0 %579, %v555
      %v581 = vpop.permute.xlu0 %580
      %v583 = vadd.f32 %v576, %v581
      %v584 = vadd.f32 %v577, %v581
      %v585 = vxor.u32 %v583, 2147483648
      %v586 = vxor.u32 %v584, 2147483648
      %v587 = vmul.f32 %v585, 1.442695
      %v588 = vpow.pop %v587
      %v589 = vmul.f32 %v586, 1.442695
      %v590 = vpow.pop %v589
      %v591 = vadd.f32 %v588, 1.0
      %v592 = vadd.f32 %v590, 1.0
      %v593 = vrcp.pop %v591
      %v594 = vmul.f32 1.0, %v593
      %v595 = vrcp.pop %v592
      %v596 = vmul.f32 1.0, %v595
      %v597 = vmul.f32 %v583, %v594
      %v598 = vmul.f32 %v584, %v596
      %v599 = vld [vmem:[%s4] sm:$0xff]
      %600 = vrot.lane.b32.xlu0 %v597, 17
      %v601 = vpop.permute.xlu0 %600
      %602 = vrot.lane.b32.xlu0 %v598, 17
      %v603 = vpop.permute.xlu0 %602
      %v604 = vlaneseq
      %v605 = vand.u32 %v604, 127
      %vm606 = vcmp.lt.s32.totalorder %v605, 17
      %v607 = vsel %vm606, %v601, %v603
      %v608 = vsel %vm606, %v603, %v601
      %v609 = vld [vmem:[%s13] sm:$0x3]
      %v611 = vlaneseq
      %v612 = vshrl.u32 %v611, 7
      %v613 = vsub.s32 0, %v612
      %v614 = vrot.slane %v609, %v613
      %v615 = vlaneseq
      %v616 = vshrl.u32 %v615, 7
      %v617 = vsub.s32 1, %v616
      %v618 = vrot.slane %v609, %v617
      %v621 = vmul.f32 %v608, %v614
      %v622 = vmul.f32 %v607, %v618
      %623 = vrot.lane.b32.xlu0 %v597, 16
      %v624 = vpop.permute.xlu0 %623
      %625 = vrot.lane.b32.xlu0 %v598, 16
      %v626 = vpop.permute.xlu0 %625
      %vm627 = vcmp.lt.s32.totalorder %v605, 16
      %v628 = vsel %vm627, %v624, %v626
      %v629 = vsel %vm627, %v626, %v624
      %s630 = scalar_lea.vmem %s13, 2
      %v631 = vld [vmem:[%s630] sm:$0x3]
      %v633 = vlaneseq
      %v634 = vshrl.u32 %v633, 7
      %v635 = vsub.s32 0, %v634
      %v636 = vrot.slane %v631, %v635
      %v637 = vlaneseq
      %v638 = vshrl.u32 %v637, 7
      %v639 = vsub.s32 1, %v638
      %v640 = vrot.slane %v631, %v639
      %v643 = vmul.f32 %v629, %v636
      %v644 = vmul.f32 %v628, %v640
      %645 = vrot.lane.b32.xlu0 %v597, 15
      %v646 = vpop.permute.xlu0 %645
      %647 = vrot.lane.b32.xlu0 %v598, 15
      %v648 = vpop.permute.xlu0 %647
      %vm649 = vcmp.lt.s32.totalorder %v605, 15
      %v650 = vsel %vm649, %v646, %v648
      %v651 = vsel %vm649, %v648, %v646
      %s652 = scalar_lea.vmem %s13, 4
      %v653 = vld [vmem:[%s652] sm:$0x3]
      %v655 = vlaneseq
      %v656 = vshrl.u32 %v655, 7
      %v657 = vsub.s32 0, %v656
      %v658 = vrot.slane %v653, %v657
      %v659 = vlaneseq
      %v660 = vshrl.u32 %v659, 7
      %v661 = vsub.s32 1, %v660
      %v662 = vrot.slane %v653, %v661
      %v665 = vmul.f32 %v651, %v658
      %v666 = vmul.f32 %v650, %v662
      %667 = vrot.lane.b32.xlu0 %v597, 1
      %v668 = vpop.permute.xlu0 %667
      %669 = vrot.lane.b32.xlu0 %v598, 1
      %v670 = vpop.permute.xlu0 %669
      %vm671 = vcmp.lt.s32.totalorder %v605, 1
      %v672 = vsel %vm671, %v668, %v670
      %v673 = vsel %vm671, %v670, %v668
      %s674 = scalar_lea.vmem %s13, 6
      %v675 = vld [vmem:[%s674] sm:$0x3]
      %v677 = vlaneseq
      %v678 = vshrl.u32 %v677, 7
      %v679 = vsub.s32 0, %v678
      %v680 = vrot.slane %v675, %v679
      %v681 = vlaneseq
      %v682 = vshrl.u32 %v681, 7
      %v683 = vsub.s32 1, %v682
      %v684 = vrot.slane %v675, %v683
      %v687 = vmul.f32 %v673, %v680
      %v688 = vmul.f32 %v672, %v684
      %s689 = scalar_lea.vmem %s13, 8
      %v690 = vld [vmem:[%s689] sm:$0x3]
      %v692 = vlaneseq
      %v693 = vshrl.u32 %v692, 7
      %v694 = vsub.s32 0, %v693
      %v695 = vrot.slane %v690, %v694
      %v696 = vlaneseq
      %v697 = vshrl.u32 %v696, 7
      %v698 = vsub.s32 1, %v697
      %v699 = vrot.slane %v690, %v698
      %v702 = vmul.f32 %v597, %v695
      %v703 = vmul.f32 %v598, %v699
      %704 = vrot.lane.b32.xlu0 %v597, 127
      %v705 = vpop.permute.xlu0 %704
      %706 = vrot.lane.b32.xlu0 %v598, 127
      %v707 = vpop.permute.xlu0 %706
      %vm708 = vcmp.lt.s32.totalorder %v605, 127
      %v709 = vsel %vm708, %v705, %v707
      %v710 = vsel %vm708, %v707, %v705
      %s711 = scalar_lea.vmem %s13, 10
      %v712 = vld [vmem:[%s711] sm:$0x3]
      %v714 = vlaneseq
      %v715 = vshrl.u32 %v714, 7
      %v716 = vsub.s32 0, %v715
      %v717 = vrot.slane %v712, %v716
      %v718 = vlaneseq
      %v719 = vshrl.u32 %v718, 7
      %v720 = vsub.s32 1, %v719
      %v721 = vrot.slane %v712, %v720
      %v724 = vmul.f32 %v709, %v717
      %v725 = vmul.f32 %v710, %v721
      %726 = vrot.lane.b32.xlu0 %v597, 113
      %v727 = vpop.permute.xlu0 %726
      %728 = vrot.lane.b32.xlu0 %v598, 113
      %v729 = vpop.permute.xlu0 %728
      %vm730 = vcmp.lt.s32.totalorder %v605, 113
      %v731 = vsel %vm730, %v727, %v729
      %v732 = vsel %vm730, %v729, %v727
      %s733 = scalar_lea.vmem %s13, 12
      %v734 = vld [vmem:[%s733] sm:$0x3]
      %v736 = vlaneseq
      %v737 = vshrl.u32 %v736, 7
      %v738 = vsub.s32 0, %v737
      %v739 = vrot.slane %v734, %v738
      %v740 = vlaneseq
      %v741 = vshrl.u32 %v740, 7
      %v742 = vsub.s32 1, %v741
      %v743 = vrot.slane %v734, %v742
      %v746 = vmul.f32 %v731, %v739
      %v747 = vmul.f32 %v732, %v743
      %748 = vrot.lane.b32.xlu0 %v597, 112
      %v749 = vpop.permute.xlu0 %748
      %750 = vrot.lane.b32.xlu0 %v598, 112
      %v751 = vpop.permute.xlu0 %750
      %vm752 = vcmp.lt.s32.totalorder %v605, 112
      %v753 = vsel %vm752, %v749, %v751
      %v754 = vsel %vm752, %v751, %v749
      %s755 = scalar_lea.vmem %s13, 14
      %v756 = vld [vmem:[%s755] sm:$0x3]
      %v758 = vlaneseq
      %v759 = vshrl.u32 %v758, 7
      %v760 = vsub.s32 0, %v759
      %v761 = vrot.slane %v756, %v760
      %v762 = vlaneseq
      %v763 = vshrl.u32 %v762, 7
      %v764 = vsub.s32 1, %v763
      %v765 = vrot.slane %v756, %v764
      %v768 = vmul.f32 %v753, %v761
      %v769 = vmul.f32 %v754, %v765
      %770 = vrot.lane.b32.xlu0 %v597, 111
      %v771 = vpop.permute.xlu0 %770
      %772 = vrot.lane.b32.xlu0 %v598, 111
      %v773 = vpop.permute.xlu0 %772
      %vm774 = vcmp.lt.s32.totalorder %v605, 111
      %v775 = vsel %vm774, %v771, %v773
      %v776 = vsel %vm774, %v773, %v771
      %s777 = scalar_lea.vmem %s13, 16
      %v778 = vld [vmem:[%s777] sm:$0x3]
      %v780 = vlaneseq
      %v781 = vshrl.u32 %v780, 7
      %v782 = vsub.s32 0, %v781
      %v783 = vrot.slane %v778, %v782
      %v784 = vlaneseq
      %v785 = vshrl.u32 %v784, 7
      %v786 = vsub.s32 1, %v785
      %v787 = vrot.slane %v778, %v786
      %v790 = vmul.f32 %v775, %v783
      %v791 = vmul.f32 %v776, %v787
      %v792 = vld [vmem:[%s541] sm:$0xff]
      %794 = vset.pattern.permute.xlu0 0
      %795 = vperm.xlu0 %794, %v792
      %v796 = vpop.permute.xlu0 %795
      %vm798 = vcmask 588800
      %v800 = vsel %vm798, %v599, 0
      %802 = vmatprep.subr.mxu0 %v622
      %803 = vmatpush1.msra.mxu0 %v621
      %804 = vmatprep.subr.mxu0 %v644
      %805 = vmatpush1.msra.mxu0 %v643
      %806 = vmatprep.subr.mxu0 %v666
      %807 = vmatpush1.msra.mxu0 %v665
      %808 = vmatprep.subr.mxu0 %v688
      %809 = vmatpush1.msra.mxu0 %v687
      %810 = vmatprep.subr.mxu0 %v703
      %811 = vmatpush1.msra.mxu0 %v702
      %812 = vmatprep.subr.mxu0 %v725
      %813 = vmatpush1.msra.mxu0 %v724
      %814 = vmatprep.subr.mxu0 %v747
      %815 = vmatpush1.msra.mxu0 %v746
      %816 = vmatprep.subr.mxu0 %v769
      %817 = vmatpush1.msra.mxu0 %v768
      %818 = vmatprep.subr.mxu0 %v791
      %819 = vmatpush1.msra.mxu0 %v790
      %820 = vmatprep.subr.mxu0 0.0
      %821 = vmatpush1.msra.mxu0 0.0
      %822 = vmatprep.subr.mxu0 0.0
      %823 = vmatpush1.msra.mxu0 0.0
      %824 = vmatprep.subr.mxu0 0.0
      %825 = vmatpush1.msra.mxu0 0.0
      %826 = vmatprep.subr.mxu0 0.0
      %827 = vmatpush1.msra.mxu0 0.0
      %828 = vmatprep.subr.mxu0 0.0
      %829 = vmatpush1.msra.mxu0 0.0
      %830 = vmatprep.subr.mxu0 0.0
      %831 = vmatpush1.msra.mxu0 0.0
      %832 = vmatprep.subr.mxu0 0.0
      %833 = vmatpush1.msra.mxu0 0.0
      %834 = vmatprep.subr.mxu0 0.0
      %835 = vmatpush1.msra.mxu0 0.0
      %836 = vmatprep.subr.mxu0 0.0
      %837 = vmatpush1.msra.mxu0 0.0
      %838 = vmatprep.subr.mxu0 0.0
      %839 = vmatpush1.msra.mxu0 0.0
      %840 = vmatprep.subr.mxu0 0.0
      %841 = vmatpush1.msra.mxu0 0.0
      %842 = vmatprep.subr.mxu0 0.0
      %843 = vmatpush1.msra.mxu0 0.0
      %844 = vmatprep.subr.mxu0 0.0
      %845 = vmatpush1.msra.mxu0 0.0
      %846 = vmatprep.subr.mxu0 0.0
      %847 = vmatpush1.msra.mxu0 0.0
      %848 = vmatprep.subr.mxu0 0.0
      %849 = vmatpush1.msra.mxu0 0.0
      %850 = vmatprep.subr.mxu0 0.0
      %851 = vmatpush1.msra.mxu0 0.0
      %852 = vmatprep.subr.mxu0 0.0
      %853 = vmatpush1.msra.mxu0 0.0
      %854 = vmatprep.subr.mxu0 0.0
      %855 = vmatpush1.msra.mxu0 0.0
      %856 = vmatprep.subr.mxu0 0.0
      %857 = vmatpush1.msra.mxu0 0.0
      %858 = vmatprep.subr.mxu0 0.0
      %859 = vmatpush1.msra.mxu0 0.0
      %860 = vmatprep.subr.mxu0 0.0
      %861 = vmatpush1.msra.mxu0 0.0
      %862 = vmatprep.subr.mxu0 0.0
      %863 = vmatpush1.msra.mxu0 0.0
      %864 = vmatprep.subr.mxu0 0.0
      %865 = vmatpush1.msra.mxu0 0.0
      %866 = vmatprep.mubr.f32.mxu0 0.0
      %867 = vmatmul.mubr.f32.gmra.mrb[0].mxu0 %v800
      %v868 = vpop.f32.mrb[0].mxu0
      %v869 = vadd.f32 %v796, %v868
      %v870 = vpop.f32.mrb[0].mxu0
      %v871 = vadd.f32 %v796, %v870
      %872 = vdwg.mxu0
      %v873 = vld [vmem:[%s7] sm:$0xff]
      %v874 = vld [vmem:[%s8] sm:$0xff]
      %v875 = vadd.f32 %v869, %v871
      %876 = vadd.xlane.f32.xlu0 %v875
      %v877 = vpop.xlane.xlu0 %876
      %v878 = vmul.f32 %v877, 0.00390625
      %v879 = vsub.f32 %v869, %v878
      %v880 = vsub.f32 %v871, %v878
      %v881 = vmul.f32 %v879, %v879
      %v882 = vmul.f32 %v880, %v880
      %v883 = vadd.f32 %v881, %v882
      %884 = vadd.xlane.f32.xlu0 %v883
      %v885 = vpop.xlane.xlu0 %884
      %v886 = vmul.f32 %v885, 0.00390625
      %v887 = vadd.f32 %v886, 1e-05
      %v888 = vrsqrt.pop %v887
      %v889 = vmul.f32 %v888, %v873
      %891 = vset.pattern.permute.xlu0 0
      %892 = vperm.xlu0 %891, %v889
      %v893 = vpop.permute.xlu0 %892
      %v895 = vmul.f32 %v879, %v893
      %v896 = vmul.f32 %v880, %v893
      %898 = vset.pattern.permute.xlu0 0
      %899 = vperm.xlu0 %898, %v874
      %v900 = vpop.permute.xlu0 %899
      %v902 = vadd.f32 %v895, %v900
      %v903 = vadd.f32 %v896, %v900
      %v904 = vxor.u32 %v902, 2147483648
      %v905 = vxor.u32 %v903, 2147483648
      %v906 = vmul.f32 %v904, 1.442695
      %v907 = vpow.pop %v906
      %v908 = vmul.f32 %v905, 1.442695
      %v909 = vpow.pop %v908
      %v910 = vadd.f32 %v907, 1.0
      %v911 = vadd.f32 %v909, 1.0
      %v912 = vrcp.pop %v910
      %v913 = vmul.f32 1.0, %v912
      %v914 = vrcp.pop %v911
      %v915 = vmul.f32 1.0, %v914
      %v916 = vmul.f32 %v902, %v913
      %v917 = vmul.f32 %v903, %v915
      %v918 = vld [vmem:[%s9] sm:$0xff]
      %919 = vrot.lane.b32.xlu0 %v916, 17
      %v920 = vpop.permute.xlu0 %919
      %921 = vrot.lane.b32.xlu0 %v917, 17
      %v922 = vpop.permute.xlu0 %921
      %v923 = vsel %vm606, %v920, %v922
      %v924 = vsel %vm606, %v922, %v920
      %v925 = vmul.f32 %v924, %v614
      %v926 = vmul.f32 %v923, %v618
      %927 = vrot.lane.b32.xlu0 %v916, 16
      %v928 = vpop.permute.xlu0 %927
      %929 = vrot.lane.b32.xlu0 %v917, 16
      %v930 = vpop.permute.xlu0 %929
      %v931 = vsel %vm627, %v928, %v930
      %v932 = vsel %vm627, %v930, %v928
      %v933 = vmul.f32 %v932, %v636
      %v934 = vmul.f32 %v931, %v640
      %935 = vrot.lane.b32.xlu0 %v916, 15
      %v936 = vpop.permute.xlu0 %935
      %937 = vrot.lane.b32.xlu0 %v917, 15
      %v938 = vpop.permute.xlu0 %937
      %v939 = vsel %vm649, %v936, %v938
      %v940 = vsel %vm649, %v938, %v936
      %v941 = vmul.f32 %v940, %v658
      %v942 = vmul.f32 %v939, %v662
      %943 = vrot.lane.b32.xlu0 %v916, 1
      %v944 = vpop.permute.xlu0 %943
      %945 = vrot.lane.b32.xlu0 %v917, 1
      %v946 = vpop.permute.xlu0 %945
      %v947 = vsel %vm671, %v944, %v946
      %v948 = vsel %vm671, %v946, %v944
      %v949 = vmul.f32 %v948, %v680
      %v950 = vmul.f32 %v947, %v684
      %v951 = vmul.f32 %v916, %v695
      %v952 = vmul.f32 %v917, %v699
      %953 = vrot.lane.b32.xlu0 %v916, 127
      %v954 = vpop.permute.xlu0 %953
      %955 = vrot.lane.b32.xlu0 %v917, 127
      %v956 = vpop.permute.xlu0 %955
      %v957 = vsel %vm708, %v954, %v956
      %v958 = vsel %vm708, %v956, %v954
      %v959 = vmul.f32 %v957, %v717
      %v960 = vmul.f32 %v958, %v721
      %961 = vrot.lane.b32.xlu0 %v916, 113
      %v962 = vpop.permute.xlu0 %961
      %963 = vrot.lane.b32.xlu0 %v917, 113
      %v964 = vpop.permute.xlu0 %963
      %v965 = vsel %vm730, %v962, %v964
      %v966 = vsel %vm730, %v964, %v962
      %v967 = vmul.f32 %v965, %v739
      %v968 = vmul.f32 %v966, %v743
      %969 = vrot.lane.b32.xlu0 %v916, 112
      %v970 = vpop.permute.xlu0 %969
      %971 = vrot.lane.b32.xlu0 %v917, 112
      %v972 = vpop.permute.xlu0 %971
      %v973 = vsel %vm752, %v970, %v972
      %v974 = vsel %vm752, %v972, %v970
      %v975 = vmul.f32 %v973, %v761
      %v976 = vmul.f32 %v974, %v765
      %977 = vrot.lane.b32.xlu0 %v916, 111
      %v978 = vpop.permute.xlu0 %977
      %979 = vrot.lane.b32.xlu0 %v917, 111
      %v980 = vpop.permute.xlu0 %979
      %v981 = vsel %vm774, %v978, %v980
      %v982 = vsel %vm774, %v980, %v978
      %v983 = vmul.f32 %v981, %v783
      %v984 = vmul.f32 %v982, %v787
      %v985 = vld [vmem:[%s10] sm:$0xff]
      %987 = vset.pattern.permute.xlu0 0
      %988 = vperm.xlu0 %987, %v985
      %v989 = vpop.permute.xlu0 %988
      %v992 = vsel %vm798, %v918, 0
      %994 = vmatprep.subr.mxu0 %v926
      %995 = vmatpush1.msra.mxu0 %v925
      %996 = vmatprep.subr.mxu0 %v934
      %997 = vmatpush1.msra.mxu0 %v933
      %998 = vmatprep.subr.mxu0 %v942
      %999 = vmatpush1.msra.mxu0 %v941
      %1000 = vmatprep.subr.mxu0 %v950
      %1001 = vmatpush1.msra.mxu0 %v949
      %1002 = vmatprep.subr.mxu0 %v952
      %1003 = vmatpush1.msra.mxu0 %v951
      %1004 = vmatprep.subr.mxu0 %v960
      %1005 = vmatpush1.msra.mxu0 %v959
      %1006 = vmatprep.subr.mxu0 %v968
      %1007 = vmatpush1.msra.mxu0 %v967
      %1008 = vmatprep.subr.mxu0 %v976
      %1009 = vmatpush1.msra.mxu0 %v975
      %1010 = vmatprep.subr.mxu0 %v984
      %1011 = vmatpush1.msra.mxu0 %v983
      %1012 = vmatprep.subr.mxu0 0.0
      %1013 = vmatpush1.msra.mxu0 0.0
      %1014 = vmatprep.subr.mxu0 0.0
      %1015 = vmatpush1.msra.mxu0 0.0
      %1016 = vmatprep.subr.mxu0 0.0
      %1017 = vmatpush1.msra.mxu0 0.0
      %1018 = vmatprep.subr.mxu0 0.0
      %1019 = vmatpush1.msra.mxu0 0.0
      %1020 = vmatprep.subr.mxu0 0.0
      %1021 = vmatpush1.msra.mxu0 0.0
      %1022 = vmatprep.subr.mxu0 0.0
      %1023 = vmatpush1.msra.mxu0 0.0
      %1024 = vmatprep.subr.mxu0 0.0
      %1025 = vmatpush1.msra.mxu0 0.0
      %1026 = vmatprep.subr.mxu0 0.0
      %1027 = vmatpush1.msra.mxu0 0.0
      %1028 = vmatprep.subr.mxu0 0.0
      %1029 = vmatpush1.msra.mxu0 0.0
      %1030 = vmatprep.subr.mxu0 0.0
      %1031 = vmatpush1.msra.mxu0 0.0
      %1032 = vmatprep.subr.mxu0 0.0
      %1033 = vmatpush1.msra.mxu0 0.0
      %1034 = vmatprep.subr.mxu0 0.0
      %1035 = vmatpush1.msra.mxu0 0.0
      %1036 = vmatprep.subr.mxu0 0.0
      %1037 = vmatpush1.msra.mxu0 0.0
      %1038 = vmatprep.subr.mxu0 0.0
      %1039 = vmatpush1.msra.mxu0 0.0
      %1040 = vmatprep.subr.mxu0 0.0
      %1041 = vmatpush1.msra.mxu0 0.0
      %1042 = vmatprep.subr.mxu0 0.0
      %1043 = vmatpush1.msra.mxu0 0.0
      %1044 = vmatprep.subr.mxu0 0.0
      %1045 = vmatpush1.msra.mxu0 0.0
      %1046 = vmatprep.subr.mxu0 0.0
      %1047 = vmatpush1.msra.mxu0 0.0
      %1048 = vmatprep.subr.mxu0 0.0
      %1049 = vmatpush1.msra.mxu0 0.0
      %1050 = vmatprep.subr.mxu0 0.0
      %1051 = vmatpush1.msra.mxu0 0.0
      %1052 = vmatprep.subr.mxu0 0.0
      %1053 = vmatpush1.msra.mxu0 0.0
      %1054 = vmatprep.subr.mxu0 0.0
      %1055 = vmatpush1.msra.mxu0 0.0
      %1056 = vmatprep.subr.mxu0 0.0
      %1057 = vmatpush1.msra.mxu0 0.0
      %1058 = vmatprep.mubr.f32.mxu0 0.0
      %1059 = vmatmul.mubr.f32.gmra.mrb[0].mxu0 %v992
      %v1060 = vpop.f32.mrb[0].mxu0
      %v1061 = vadd.f32 %v989, %v1060
      %v1062 = vpop.f32.mrb[0].mxu0
      %v1063 = vadd.f32 %v989, %v1062
      %1064 = vdwg.mxu0
      %1065 = vst [vmem:[%s546] sm:$0xff] %v1061
      %1066 = vst [vmem:[%s546 + $0x8] sm:$0xff] %v1063
      %v1067 = vld [vmem:[%s11] sm:$0xff]
      %v1068 = vld [vmem:[%s11 + $0x8] sm:$0xff]
      %1069 = vrot.lane.b32.xlu0 %v1061, 17
      %v1070 = vpop.permute.xlu0 %1069
      %1071 = vrot.lane.b32.xlu0 %v1063, 17
      %v1072 = vpop.permute.xlu0 %1071
      %v1073 = vsel %vm606, %v1070, %v1072
      %v1074 = vsel %vm606, %v1072, %v1070
      %v1075 = vld [vmem:[%s13] sm:$0x3]
      %v1077 = vlaneseq
      %v1078 = vshrl.u32 %v1077, 7
      %v1079 = vsub.s32 0, %v1078
      %v1080 = vrot.slane %v1075, %v1079
      %v1081 = vlaneseq
      %v1082 = vshrl.u32 %v1081, 7
      %v1083 = vsub.s32 1, %v1082
      %v1084 = vrot.slane %v1075, %v1083
      %v1087 = vmul.f32 %v1074, %v1080
      %v1088 = vmul.f32 %v1073, %v1084
      %1089 = vrot.lane.b32.xlu0 %v1061, 16
      %v1090 = vpop.permute.xlu0 %1089
      %1091 = vrot.lane.b32.xlu0 %v1063, 16
      %v1092 = vpop.permute.xlu0 %1091
      %v1093 = vsel %vm627, %v1090, %v1092
      %v1094 = vsel %vm627, %v1092, %v1090
      %v1095 = vld [vmem:[%s630] sm:$0x3]
      %v1097 = vlaneseq
      %v1098 = vshrl.u32 %v1097, 7
      %v1099 = vsub.s32 0, %v1098
      %v1100 = vrot.slane %v1095, %v1099
      %v1101 = vlaneseq
      %v1102 = vshrl.u32 %v1101, 7
      %v1103 = vsub.s32 1, %v1102
      %v1104 = vrot.slane %v1095, %v1103
      %v1107 = vmul.f32 %v1094, %v1100
      %v1108 = vmul.f32 %v1093, %v1104
      %1109 = vrot.lane.b32.xlu0 %v1061, 15
      %v1110 = vpop.permute.xlu0 %1109
      %1111 = vrot.lane.b32.xlu0 %v1063, 15
      %v1112 = vpop.permute.xlu0 %1111
      %v1113 = vsel %vm649, %v1110, %v1112
      %v1114 = vsel %vm649, %v1112, %v1110
      %v1115 = vld [vmem:[%s652] sm:$0x3]
      %v1117 = vlaneseq
      %v1118 = vshrl.u32 %v1117, 7
      %v1119 = vsub.s32 0, %v1118
      %v1120 = vrot.slane %v1115, %v1119
      %v1121 = vlaneseq
      %v1122 = vshrl.u32 %v1121, 7
      %v1123 = vsub.s32 1, %v1122
      %v1124 = vrot.slane %v1115, %v1123
      %v1127 = vmul.f32 %v1114, %v1120
      %v1128 = vmul.f32 %v1113, %v1124
      %1129 = vrot.lane.b32.xlu0 %v1061, 1
      %v1130 = vpop.permute.xlu0 %1129
      %1131 = vrot.lane.b32.xlu0 %v1063, 1
      %v1132 = vpop.permute.xlu0 %1131
      %v1133 = vsel %vm671, %v1130, %v1132
      %v1134 = vsel %vm671, %v1132, %v1130
      %v1135 = vld [vmem:[%s674] sm:$0x3]
      %v1137 = vlaneseq
      %v1138 = vshrl.u32 %v1137, 7
      %v1139 = vsub.s32 0, %v1138
      %v1140 = vrot.slane %v1135, %v1139
      %v1141 = vlaneseq
      %v1142 = vshrl.u32 %v1141, 7
      %v1143 = vsub.s32 1, %v1142
      %v1144 = vrot.slane %v1135, %v1143
      %v1147 = vmul.f32 %v1134, %v1140
      %v1148 = vmul.f32 %v1133, %v1144
      %v1149 = vld [vmem:[%s689] sm:$0x3]
      %v1151 = vlaneseq
      %v1152 = vshrl.u32 %v1151, 7
      %v1153 = vsub.s32 0, %v1152
      %v1154 = vrot.slane %v1149, %v1153
      %v1155 = vlaneseq
      %v1156 = vshrl.u32 %v1155, 7
      %v1157 = vsub.s32 1, %v1156
      %v1158 = vrot.slane %v1149, %v1157
      %v1161 = vmul.f32 %v1061, %v1154
      %v1162 = vmul.f32 %v1063, %v1158
      %1163 = vrot.lane.b32.xlu0 %v1061, 127
      %v1164 = vpop.permute.xlu0 %1163
      %1165 = vrot.lane.b32.xlu0 %v1063, 127
      %v1166 = vpop.permute.xlu0 %1165
      %v1167 = vsel %vm708, %v1164, %v1166
      %v1168 = vsel %vm708, %v1166, %v1164
      %v1169 = vld [vmem:[%s711] sm:$0x3]
      %v1171 = vlaneseq
      %v1172 = vshrl.u32 %v1171, 7
      %v1173 = vsub.s32 0, %v1172
      %v1174 = vrot.slane %v1169, %v1173
      %v1175 = vlaneseq
      %v1176 = vshrl.u32 %v1175, 7
      %v1177 = vsub.s32 1, %v1176
      %v1178 = vrot.slane %v1169, %v1177
      %v1181 = vmul.f32 %v1167, %v1174
      %v1182 = vmul.f32 %v1168, %v1178
      %1183 = vrot.lane.b32.xlu0 %v1061, 113
      %v1184 = vpop.permute.xlu0 %1183
      %1185 = vrot.lane.b32.xlu0 %v1063, 113
      %v1186 = vpop.permute.xlu0 %1185
      %v1187 = vsel %vm730, %v1184, %v1186
      %v1188 = vsel %vm730, %v1186, %v1184
      %v1189 = vld [vmem:[%s733] sm:$0x3]
      %v1191 = vlaneseq
      %v1192 = vshrl.u32 %v1191, 7
      %v1193 = vsub.s32 0, %v1192
      %v1194 = vrot.slane %v1189, %v1193
      %v1195 = vlaneseq
      %v1196 = vshrl.u32 %v1195, 7
      %v1197 = vsub.s32 1, %v1196
      %v1198 = vrot.slane %v1189, %v1197
      %v1201 = vmul.f32 %v1187, %v1194
      %v1202 = vmul.f32 %v1188, %v1198
      %1203 = vrot.lane.b32.xlu0 %v1061, 112
      %v1204 = vpop.permute.xlu0 %1203
      %1205 = vrot.lane.b32.xlu0 %v1063, 112
      %v1206 = vpop.permute.xlu0 %1205
      %v1207 = vsel %vm752, %v1204, %v1206
      %v1208 = vsel %vm752, %v1206, %v1204
      %v1209 = vld [vmem:[%s755] sm:$0x3]
      %v1211 = vlaneseq
      %v1212 = vshrl.u32 %v1211, 7
      %v1213 = vsub.s32 0, %v1212
      %v1214 = vrot.slane %v1209, %v1213
      %v1215 = vlaneseq
      %v1216 = vshrl.u32 %v1215, 7
      %v1217 = vsub.s32 1, %v1216
      %v1218 = vrot.slane %v1209, %v1217
      %v1221 = vmul.f32 %v1207, %v1214
      %v1222 = vmul.f32 %v1208, %v1218
      %1223 = vrot.lane.b32.xlu0 %v1061, 111
      %v1224 = vpop.permute.xlu0 %1223
      %1225 = vrot.lane.b32.xlu0 %v1063, 111
      %v1226 = vpop.permute.xlu0 %1225
      %v1227 = vsel %vm774, %v1224, %v1226
      %v1228 = vsel %vm774, %v1226, %v1224
      %v1229 = vld [vmem:[%s777] sm:$0x3]
      %v1231 = vlaneseq
      %v1232 = vshrl.u32 %v1231, 7
      %v1233 = vsub.s32 0, %v1232
      %v1234 = vrot.slane %v1229, %v1233
      %v1235 = vlaneseq
      %v1236 = vshrl.u32 %v1235, 7
      %v1237 = vsub.s32 1, %v1236
      %v1238 = vrot.slane %v1229, %v1237
      %v1241 = vmul.f32 %v1227, %v1234
      %v1242 = vmul.f32 %v1228, %v1238
      %v1244 = vsel %vm798, %v1067, 0
      %v1247 = vsel %vm798, %v1068, 0
      %1249 = vmatprep.subr.mxu0 %v1088
      %1250 = vmatpush1.msra.mxu0 %v1087
      %1251 = vmatprep.subr.mxu0 %v1108
      %1252 = vmatpush1.msra.mxu0 %v1107
      %1253 = vmatprep.subr.mxu0 %v1128
      %1254 = vmatpush1.msra.mxu0 %v1127
      %1255 = vmatprep.subr.mxu0 %v1148
      %1256 = vmatpush1.msra.mxu0 %v1147
      %1257 = vmatprep.subr.mxu0 %v1162
      %1258 = vmatpush1.msra.mxu0 %v1161
      %1259 = vmatprep.subr.mxu0 %v1182
      %1260 = vmatpush1.msra.mxu0 %v1181
      %1261 = vmatprep.subr.mxu0 %v1202
      %1262 = vmatpush1.msra.mxu0 %v1201
      %1263 = vmatprep.subr.mxu0 %v1222
      %1264 = vmatpush1.msra.mxu0 %v1221
      %1265 = vmatprep.subr.mxu0 %v1242
      %1266 = vmatpush1.msra.mxu0 %v1241
      %1267 = vmatprep.subr.mxu0 0.0
      %1268 = vmatpush1.msra.mxu0 0.0
      %1269 = vmatprep.subr.mxu0 0.0
      %1270 = vmatpush1.msra.mxu0 0.0
      %1271 = vmatprep.subr.mxu0 0.0
      %1272 = vmatpush1.msra.mxu0 0.0
      %1273 = vmatprep.subr.mxu0 0.0
      %1274 = vmatpush1.msra.mxu0 0.0
      %1275 = vmatprep.subr.mxu0 0.0
      %1276 = vmatpush1.msra.mxu0 0.0
      %1277 = vmatprep.subr.mxu0 0.0
      %1278 = vmatpush1.msra.mxu0 0.0
      %1279 = vmatprep.subr.mxu0 0.0
      %1280 = vmatpush1.msra.mxu0 0.0
      %1281 = vmatprep.subr.mxu0 0.0
      %1282 = vmatpush1.msra.mxu0 0.0
      %1283 = vmatprep.subr.mxu0 0.0
      %1284 = vmatpush1.msra.mxu0 0.0
      %1285 = vmatprep.subr.mxu0 0.0
      %1286 = vmatpush1.msra.mxu0 0.0
      %1287 = vmatprep.subr.mxu0 0.0
      %1288 = vmatpush1.msra.mxu0 0.0
      %1289 = vmatprep.subr.mxu0 0.0
      %1290 = vmatpush1.msra.mxu0 0.0
      %1291 = vmatprep.subr.mxu0 0.0
      %1292 = vmatpush1.msra.mxu0 0.0
      %1293 = vmatprep.subr.mxu0 0.0
      %1294 = vmatpush1.msra.mxu0 0.0
      %1295 = vmatprep.subr.mxu0 0.0
      %1296 = vmatpush1.msra.mxu0 0.0
      %1297 = vmatprep.subr.mxu0 0.0
      %1298 = vmatpush1.msra.mxu0 0.0
      %1299 = vmatprep.subr.mxu0 0.0
      %1300 = vmatpush1.msra.mxu0 0.0
      %1301 = vmatprep.subr.mxu0 0.0
      %1302 = vmatpush1.msra.mxu0 0.0
      %1303 = vmatprep.subr.mxu0 0.0
      %1304 = vmatpush1.msra.mxu0 0.0
      %1305 = vmatprep.subr.mxu0 0.0
      %1306 = vmatpush1.msra.mxu0 0.0
      %1307 = vmatprep.subr.mxu0 0.0
      %1308 = vmatpush1.msra.mxu0 0.0
      %1309 = vmatprep.subr.mxu0 0.0
      %1310 = vmatpush1.msra.mxu0 0.0
      %1311 = vmatprep.subr.mxu0 0.0
      %1312 = vmatpush1.msra.mxu0 0.0
      %1313 = vmatprep.mubr.f32.mxu0 0.0
      %1314 = vmatmul.mubr.f32.gmra.mrb[0].mxu0 %v1244
      %v1315 = vpop.f32.mrb[0].mxu0
      %v1316 = vadd.f32 0.0, %v1315
      %v1317 = vpop.f32.mrb[0].mxu0
      %v1318 = vadd.f32 0.0, %v1317
      %1319 = vmatprep.mubr.f32.mxu0 0.0
      %1320 = vmatmul.mubr.f32.gmra.mrb[0].mxu0 %v1247
      %v1321 = vpop.f32.mrb[0].mxu0
      %v1322 = vadd.f32 0.0, %v1321
      %v1323 = vpop.f32.mrb[0].mxu0
      %v1324 = vadd.f32 0.0, %v1323
      %1325 = vdwg.mxu0
      %v1326 = vld [vmem:[%s14] sm:$0xff]
      %v1327 = vld [vmem:[%s14 + $0x8] sm:$0xff]
      %v1328 = vld [vmem:[%s14 + $0x10] sm:$0xff]
      %v1329 = vld [vmem:[%s14 + $0x18] sm:$0xff]
      %v1330 = vld [vmem:[%s14 + $0x20] sm:$0xff]
      %v1331 = vld [vmem:[%s14 + $0x28] sm:$0xff]
      %v1332 = vld [vmem:[%s14 + $0x30] sm:$0xff]
      %v1333 = vld [vmem:[%s14 + $0x38] sm:$0xff]
      %v1334 = vld [vmem:[%s14 + $0x40] sm:$0xff]
      %v1335 = vld [vmem:[%s14 + $0x48] sm:$0xff]
      %v1336 = vld [vmem:[%s14 + $0x50] sm:$0xff]
      %v1337 = vld [vmem:[%s14 + $0x58] sm:$0xff]
      %v1338 = vld [vmem:[%s14 + $0x60] sm:$0xff]
      %v1339 = vld [vmem:[%s14 + $0x68] sm:$0xff]
      %v1340 = vld [vmem:[%s14 + $0x70] sm:$0xff]
      %v1341 = vld [vmem:[%s14 + $0x78] sm:$0xff]
      %v1342 = vld [vmem:[%s14 + $0x80] sm:$0xff]
      %v1343 = vld [vmem:[%s14 + $0x88] sm:$0xff]
      %v1344 = vld [vmem:[%s14 + $0x90] sm:$0xff]
      %v1345 = vld [vmem:[%s14 + $0x98] sm:$0xff]
      %v1346 = vld [vmem:[%s14 + $0xa0] sm:$0xff]
      %v1347 = vld [vmem:[%s14 + $0xa8] sm:$0xff]
      %v1348 = vld [vmem:[%s14 + $0xb0] sm:$0xff]
      %v1349 = vld [vmem:[%s14 + $0xb8] sm:$0xff]
      %v1350 = vld [vmem:[%s14 + $0xc0] sm:$0xff]
      %v1351 = vld [vmem:[%s14 + $0xc8] sm:$0xff]
      %v1352 = vld [vmem:[%s14 + $0xd0] sm:$0xff]
      %v1353 = vld [vmem:[%s14 + $0xd8] sm:$0xff]
      %v1354 = vld [vmem:[%s14 + $0xe0] sm:$0xff]
      %v1355 = vld [vmem:[%s14 + $0xe8] sm:$0xff]
      %v1356 = vld [vmem:[%s14 + $0xf0] sm:$0xff]
      %v1357 = vld [vmem:[%s14 + $0xf8] sm:$0xff]
      %v1358 = vld [vmem:[%s12] sm:$0xff]
      %v1359 = vld [vmem:[%s12 + $0x8] sm:$0xff]
      %1361 = vset.pattern.permute.xlu0 0
      %1362 = vperm.xlu0 %1361, %v1358
      %v1363 = vpop.permute.xlu0 %1362
      %1366 = vset.pattern.permute.xlu0 0
      %1367 = vperm.xlu0 %1366, %v1359
      %v1368 = vpop.permute.xlu0 %1367
      %1370 = vmatprep.subr.mxu0 0.0
      %1371 = vmatpush1.msra.mxu0 %v1326
      %1372 = vmatprep.subr.mxu0 0.0
      %1373 = vmatpush1.msra.mxu0 %v1327
      %1374 = vmatprep.subr.mxu0 0.0
      %1375 = vmatpush1.msra.mxu0 %v1328
      %1376 = vmatprep.subr.mxu0 0.0
      %1377 = vmatpush1.msra.mxu0 %v1329
      %1378 = vmatprep.subr.mxu0 0.0
      %1379 = vmatpush1.msra.mxu0 %v1330
      %1380 = vmatprep.subr.mxu0 0.0
      %1381 = vmatpush1.msra.mxu0 %v1331
      %1382 = vmatprep.subr.mxu0 0.0
      %1383 = vmatpush1.msra.mxu0 %v1332
      %1384 = vmatprep.subr.mxu0 0.0
      %1385 = vmatpush1.msra.mxu0 %v1333
      %1386 = vmatprep.subr.mxu0 0.0
      %1387 = vmatpush1.msra.mxu0 %v1334
      %1388 = vmatprep.subr.mxu0 0.0
      %1389 = vmatpush1.msra.mxu0 %v1335
      %1390 = vmatprep.subr.mxu0 0.0
      %1391 = vmatpush1.msra.mxu0 %v1336
      %1392 = vmatprep.subr.mxu0 0.0
      %1393 = vmatpush1.msra.mxu0 %v1337
      %1394 = vmatprep.subr.mxu0 0.0
      %1395 = vmatpush1.msra.mxu0 %v1338
      %1396 = vmatprep.subr.mxu0 0.0
      %1397 = vmatpush1.msra.mxu0 %v1339
      %1398 = vmatprep.subr.mxu0 0.0
      %1399 = vmatpush1.msra.mxu0 %v1340
      %1400 = vmatprep.subr.mxu0 0.0
      %1401 = vmatpush1.msra.mxu0 %v1341
      %1402 = vmatprep.subr.mxu0 0.0
      %1403 = vmatpush1.msra.mxu0 %v1342
      %1404 = vmatprep.subr.mxu0 0.0
      %1405 = vmatpush1.msra.mxu0 %v1343
      %1406 = vmatprep.subr.mxu0 0.0
      %1407 = vmatpush1.msra.mxu0 %v1344
      %1408 = vmatprep.subr.mxu0 0.0
      %1409 = vmatpush1.msra.mxu0 %v1345
      %1410 = vmatprep.subr.mxu0 0.0
      %1411 = vmatpush1.msra.mxu0 %v1346
      %1412 = vmatprep.subr.mxu0 0.0
      %1413 = vmatpush1.msra.mxu0 %v1347
      %1414 = vmatprep.subr.mxu0 0.0
      %1415 = vmatpush1.msra.mxu0 %v1348
      %1416 = vmatprep.subr.mxu0 0.0
      %1417 = vmatpush1.msra.mxu0 %v1349
      %1418 = vmatprep.subr.mxu0 0.0
      %1419 = vmatpush1.msra.mxu0 %v1350
      %1420 = vmatprep.subr.mxu0 0.0
      %1421 = vmatpush1.msra.mxu0 %v1351
      %1422 = vmatprep.subr.mxu0 0.0
      %1423 = vmatpush1.msra.mxu0 %v1352
      %1424 = vmatprep.subr.mxu0 0.0
      %1425 = vmatpush1.msra.mxu0 %v1353
      %1426 = vmatprep.subr.mxu0 0.0
      %1427 = vmatpush1.msra.mxu0 %v1354
      %1428 = vmatprep.subr.mxu0 0.0
      %1429 = vmatpush1.msra.mxu0 %v1355
      %1430 = vmatprep.subr.mxu0 0.0
      %1431 = vmatpush1.msra.mxu0 %v1356
      %1432 = vmatprep.subr.mxu0 0.0
      %1433 = vmatpush1.msra.mxu0 %v1357
      %1434 = vmatprep.mubr.f32.mxu0 %v1318
      %1435 = vmatmul.mubr.f32.gmra.mrb[0].mxu0 %v1316
      %v1436 = vpop.f32.mrb[0].mxu0
      %v1437 = vadd.f32 %v1363, %v1436
      %v1438 = vpop.f32.mrb[0].mxu0
      %1439 = vmatprep.mubr.f32.mxu0 %v1324
      %1440 = vmatmul.mubr.f32.gmra.mrb[0].mxu0 %v1322
      %v1441 = vpop.f32.mrb[0].mxu0
      %v1442 = vadd.f32 %v1368, %v1441
      %v1443 = vpop.f32.mrb[0].mxu0
      %1444 = vdwg.mxu0
      %vm1445 = vcmask 523264
      %1446 = vst.msk [vmem:[%s551] sm:$0xff] %vm1445, %v1437
      %1447 = vst.msk [vmem:[%s551 + $0x8] sm:$0xff] %vm1445, %v1442
      %p1448 = scmp.lt.s32.totalorder %s28, 1
      %s1449 = scalar_select %p1448, %s28, 1
      %s1450 = smul.addr %s1449, 2
      %s1451 = smul.addr %s1450, 8
      %s1452 = scalar_lea.vmem %s15, %s1451
      %p1453 = scmp.lt.s32.totalorder %s28, 1
      %s1454 = scalar_select %p1453, %s28, 1
      %s1455 = smul.addr %s1454, 2
      %s1456 = smul.addr %s1455, 8
      %s1457 = scalar_lea.vmem %s16, %s1456
      // Predicated region
      $region81: #{_down_block_impl.1} parent=79 // pred_check
        %p1458 = pneg %p371
      $region82: #{_down_block_impl.1} parent=79 // pred_check_branch
        %1460 = sbr.rel (%p1458) target = $region84
      $region83: #{_down_block_impl.1} parent=79 // pred_region
        _
      $region84: #{_down_block_impl.1} parent=79 // pred_fallthru
        _
      // Predicated region
      $region85: #{_down_block_impl.1} parent=79 // pred_check
        %p1461 = pneg %p397
      $region86: #{_down_block_impl.1} parent=79 // pred_check_branch
        %1463 = sbr.rel (%p1461) target = $region88
      $region87: #{_down_block_impl.1} parent=79 // pred_region
        _
      $region88: #{_down_block_impl.1} parent=79 // pred_fallthru
        _
    $region80: #{_down_block_impl.1} parent=5 // pred_fallthru
      _
    %p1464 = scmp.le.s32.totalorder 2, %s23
    // Predicated region
    $region89: #{_down_block_impl.1} parent=5 // pred_check
      %p1465 = pneg %p1464
    $region90: #{_down_block_impl.1} parent=5 // pred_check_branch
      %1467 = sbr.rel (%p1465) target = $region92
    $region91: #{_down_block_impl.1} parent=5 // pred_region
      %s1468 = ssub.s32 %s23, 2
      // Predicated region
      $region93: #{_down_block_impl.1} parent=91 // pred_check
        %p1469 = pneg %p377
      $region94: #{_down_block_impl.1} parent=91 // pred_check_branch
        %1471 = sbr.rel (%p1469) target = $region96
      $region95: #{_down_block_impl.1} parent=91 // pred_region
        %p1472 = scmp.lt.s32.totalorder %s29, 1
        %s1473 = scalar_select %p1472, %s29, 1
        %s1474 = smul.addr %s1473, 2
        %s1475 = smul.addr %s1474, 8
        %s1476 = scalar_lea.vmem %s15, %s1475
      $region96: #{_down_block_impl.1} parent=91 // pred_fallthru
        _
      // Predicated region
      $region97: #{_down_block_impl.1} parent=91 // pred_check
        %p1477 = pneg %p403
      $region98: #{_down_block_impl.1} parent=91 // pred_check_branch
        %1479 = sbr.rel (%p1477) target = $region100
      $region99: #{_down_block_impl.1} parent=91 // pred_region
        %p1480 = scmp.lt.s32.totalorder %s29, 1
        %s1481 = scalar_select %p1480, %s29, 1
        %s1482 = smul.addr %s1481, 2
        %s1483 = smul.addr %s1482, 8
        %s1484 = scalar_lea.vmem %s16, %s1483
      $region100: #{_down_block_impl.1} parent=91 // pred_fallthru
        _
    $region92: #{_down_block_impl.1} parent=5 // pred_fallthru
      _
  $region6: #{_down_block_impl.1} parent=0 // loop_footer
    %s27 = sadd.s32 1, %s23
  $region7: #{_down_block_impl.1} parent=0 // loop_footer_branch
    %22 = sbr.rel target = $region3
  $region8: #{_down_block_impl.1} parent=0 // loop_exit
    _

</llo_original>
